<compile_context>
chip_gen: v7x
topology: tpu7x:2x2x1
jax: 0.10.0
libtpu: 0.0.40
codegen_flags: <defaults>
</compile_context>

<pallas_src>
import functools
import math

import jax
import jax.numpy as jnp
from jax.experimental import pallas as pl
from jax.experimental.pallas import tpu as pltpu

_MIB = 1 << 20


def _vmem_limit(nbytes):
    """Explicit scoped-VMEM request, clamped to a v7x-safe range."""
    return int(min(max(nbytes, 4 * _MIB), 64 * _MIB))


# ----------------------------------------------------------------------------
# Kernel 1: Laplacian row-sums  (B, K1, N, N) -> (B, K1, N)
# ----------------------------------------------------------------------------
def _rowsum_kernel(lr_ref, li_ref, sr_ref, si_ref):
    # lr/li: (1, K1, TN, TC); sr/si: (1, K1, TN), resident across the column
    # (reduction) grid axis -> init at col 0, accumulate afterwards.
    @pl.when(pl.program_id(2) == 0)
    def _():
        sr_ref[...] = jnp.zeros_like(sr_ref)
        si_ref[...] = jnp.zeros_like(si_ref)

    sr_ref[0] += jnp.sum(lr_ref[0], axis=-1)
    si_ref[0] += jnp.sum(li_ref[0], axis=-1)


def _pick_rowsum_tiles(n, k1, itemsize, budget_bytes):
    """Row/column tiles obeying the (8,128) BlockSpec rule and a VMEM budget."""
    def fits(tn, tc):
        # 2 operands (real + imag) x 2 pipeline buffers per input block.
        return 2 * 2 * k1 * tn * tc * itemsize <= budget_bytes

    row_cands = [t for t in (2048, 1024, 512, 256, 128) if n % t == 0]
    col_cands = [t for t in (4096, 2048, 1024, 512, 256, 128) if n % t == 0]
    if fits(n, n):
        return n, n
    for tn in row_cands:                       # full columns, shrink row tile
        if fits(tn, n):
            return tn, n
    tn = row_cands[-1] if row_cands else n     # add a column reduction axis
    for tc in col_cands:
        if fits(tn, tc):
            return tn, tc
    # TODO(synk): remainder-handling path for huge N not divisible by 128.
    return n, n


def lap_rowsums(l_real, l_imag, budget_bytes=24 * _MIB):
    B, K1, N, _ = l_real.shape
    itemsize = l_real.dtype.itemsize
    tn, tc = _pick_rowsum_tiles(N, K1, itemsize, budget_bytes)
    grid = (B, N // tn, N // tc)
    vmem_bytes = _vmem_limit(2 * 2 * K1 * tn * tc * itemsize
                             + 2 * 2 * K1 * tn * itemsize + 2 * _MIB)
    out_shape = (jax.ShapeDtypeStruct((B, K1, N), l_real.dtype),
                 jax.ShapeDtypeStruct((B, K1, N), l_real.dtype))
    return pl.pallas_call(
        _rowsum_kernel,
        out_shape=out_shape,
        grid=grid,
        in_specs=[pl.BlockSpec((1, K1, tn, tc), lambda b, t, c: (b, 0, t, c)),
                  pl.BlockSpec((1, K1, tn, tc), lambda b, t, c: (b, 0, t, c))],
        out_specs=[pl.BlockSpec((1, K1, tn), lambda b, t, c: (b, 0, t)),
                   pl.BlockSpec((1, K1, tn), lambda b, t, c: (b, 0, t))],
        compiler_params=pltpu.CompilerParams(
            dimension_semantics=("parallel", "parallel", "arbitrary"),
            vmem_limit_bytes=vmem_bytes),
    )(l_real, l_imag)


# ----------------------------------------------------------------------------
# Kernel 2: fused conv1 -> conv2(+complex_relu) -> 1x1-conv head -> node mean
# ----------------------------------------------------------------------------
def _fused_chebnet_kernel(sr_ref, si_ref, xr_ref, xi_ref,
                          w1r_ref, w1i_ref, w2r_ref, w2i_ref,
                          hwr_ref, hwi_ref, hb_ref, mmat_ref,
                          o_ref, *, k1, layer, f_hid):
    """One group of G batch elements, batch folded onto the lane axis.

    Blocks (lane axis = G*N):
      sr/si   : (1, K1, G*N)  Laplacian row-sums real / imag
      xr/xi   : (1, C,  G*N)  node features real / imag (channels-first)
      w*r/w*i : (K1*F, Cin)   ChebConv weights stacked on output rows
      hwr/hwi : (Fo, F)       head 1x1-conv weight, real / imag halves of cat
      hb      : (Fo, 1)       head bias
      mmat    : (G*N, G)      block-diagonal per-graph mean matrix (1/N)
      out     : (1, Fo, G)
    """
    sr = sr_ref[0]                                     # (K1, GN)
    si = si_ref[0]

    def cheb_conv(ar, ai, wr_big, wi_big):
        # One small MXU dot per operand (no scratch, no padding), then a tiny
        # unrolled VPU recombination over the K+1 Chebyshev orders.
        vr = jnp.dot(wr_big, ar, preferred_element_type=jnp.float32)  # (K1*F, GN)
        vi = jnp.dot(wi_big, ai, preferred_element_type=jnp.float32)  # (K1*F, GN)
        r = None
        im = None
        for k in range(k1):                            # K+1 is tiny & static
            vrk = vr[k * f_hid:(k + 1) * f_hid, :]     # (F, GN) static slice
            vik = vi[k * f_hid:(k + 1) * f_hid, :]
            srk = sr[k:k + 1, :]                       # (1, GN)
            sik = si[k:k + 1, :]
            tr = srk * vrk - sik * vik
            ti = sik * vrk + srk * vik
            r = tr if r is None else r + tr
            im = ti if im is None else im + ti
        return r, im                                   # (F, GN) each

    # conv1
    r, im = cheb_conv(xr_ref[0], xi_ref[0], w1r_ref[...], w1i_ref[...])
    # conv2 (+ complex_relu) applied (layer - 1) times, exactly like PyTorch.
    for _ in range(1, layer):
        r, im = cheb_conv(r, im, w2r_ref[...], w2i_ref[...])
        r_pre = r
        r = jnp.maximum(r, 0.0)
        im = jnp.where(r_pre >= 0.0, im, 0.0)          # complex_relu (select)

    # head: cat(real, imag) -> Conv1d(2F -> Fo, k=1) -> per-graph node mean.
    y = (jnp.dot(hwr_ref[...], r, preferred_element_type=jnp.float32) +
         jnp.dot(hwi_ref[...], im, preferred_element_type=jnp.float32))  # (Fo, GN)
    ym = jnp.dot(y, mmat_ref[...], preferred_element_type=jnp.float32)   # (Fo, G)
    o_ref[0] = (ym + hb_ref[...]).astype(o_ref.dtype)


def _stack_cheb_weights(w):
    """(K1, Cin, F) -> (K1*F, Cin); row k*F + f holds w[k, :, f]."""
    K1, Cin, F = w.shape
    return jnp.transpose(w, (0, 2, 1)).reshape(K1 * F, Cin)


def _pick_group(batch, n, k1, c_in, f_hid, fo, budget_bytes=8 * _MIB):
    """Largest divisor G of `batch` whose per-step working set fits the budget
    and whose packed lane width G*N stays modest."""
    per_elem_f32 = (2 * (2 * k1 + 2 * c_in)            # double-buffered s/x blocks
                    + 4 * k1 * f_hid + 8 * max(c_in, f_hid) + fo) * n
    g = 1
    for cand in range(1, batch + 1):
        if batch % cand:
            continue
        if cand * n <= 2048 and cand * per_elem_f32 * 4 <= budget_bytes:
            g = cand
    return g


# ----------------------------------------------------------------------------
# ChebNet forward (Pallas) + parameter init
# ----------------------------------------------------------------------------
def init_cheb_weights(key, K1, in_c, out_c):
    k1, k2 = jax.random.split(key)
    stdv = 1.0 / math.sqrt(out_c)
    wr = jax.random.uniform(k1, (K1, in_c, out_c), jnp.float32, -stdv, stdv)
    wi = jax.random.uniform(k2, (K1, in_c, out_c), jnp.float32, -stdv, stdv)
    mag = jnp.sqrt(wr ** 2 + wi ** 2)
    return wr / mag, wi / mag


def init_params(key, in_c, num_filter, K):
    K1 = K + 1
    k1, k2, k3, k4 = jax.random.split(key, 4)
    w1r, w1i = init_cheb_weights(k1, K1, in_c, num_filter)
    w2r, w2i = init_cheb_weights(k2, K1, num_filter, num_filter)
    fan_in = num_filter * 2                            # Conv1d(2F -> F, k=1)
    bound = 1.0 / math.sqrt(fan_in)
    conv_w = jax.random.uniform(k3, (num_filter, 2 * num_filter),
                                jnp.float32, -bound, bound)
    conv_b = jax.random.uniform(k4, (1, num_filter), jnp.float32, -bound, bound)
    return dict(w1r=w1r, w1i=w1i, w2r=w2r, w2i=w2i,
                conv_w=conv_w, conv_b=conv_b)


def chebnet_forward(x_real, x_imag, lap_real, lap_imag, params, layer=2):
    assert layer >= 1
    B, N, C = x_real.shape
    K1, _, F = params["w1r"].shape
    Fo = params["conv_w"].shape[0]

    # (1) Laplacian row-sums: only O(K1*N) per batch element reaches the fused
    #     kernel; the O(N^2) operand is streamed exactly once.
    sr, si = lap_rowsums(lap_real, lap_imag)

    # (2) fold G batch elements onto the lane axis per grid step.
    #     (On v7x with tiny B this trades one idle TensorCore for lane packing;
    #      both are sub-microsecond at these sizes.)
    G = _pick_group(B, N, K1, C, F, Fo)
    ngrp = B // G
    GN = G * N

    def group_lanes(a, ch):            # (B, ch, N) -> (ngrp, ch, G*N), lane = g*N+n
        return a.reshape(ngrp, G, ch, N).transpose(0, 2, 1, 3).reshape(ngrp, ch, GN)

    sr_g = group_lanes(sr, K1)
    si_g = group_lanes(si, K1)
    xr_g = group_lanes(jnp.transpose(x_real, (0, 2, 1)), C)
    xi_g = group_lanes(jnp.transpose(x_imag, (0, 2, 1)), C)

    # (3) packed weights & head params (host-side layout plumbing).
    w1r = _stack_cheb_weights(params["w1r"])           # (K1*F, C)
    w1i = _stack_cheb_weights(params["w1i"])
    w2r = _stack_cheb_weights(params["w2r"])           # (K1*F, F)
    w2i = _stack_cheb_weights(params["w2i"])
    hwr = params["conv_w"][:, :F]                      # (Fo, F) real half of cat
    hwi = params["conv_w"][:, F:]                      # (Fo, F) imag half of cat
    hb = params["conv_b"].reshape(Fo, 1)               # (Fo, 1)

    # block-diagonal per-graph mean matrix over the packed lane axis.
    seg = jnp.repeat(jnp.arange(G), N)
    mmat = (seg[:, None] == jnp.arange(G)[None, :]).astype(jnp.float32) / N  # (GN, G)

    kernel = functools.partial(_fused_chebnet_kernel, k1=K1, layer=layer, f_hid=F)

    vmem_bytes = _vmem_limit(
        4 * (2 * (2 * K1 + 2 * C) * GN                       # double-buffered s/x
             + 2 * (2 * K1 * F * (C + F) + Fo * (2 * F + 1) + GN * G)
             + (4 * K1 * F + 8 * max(C, F) + Fo) * GN        # live intermediates
             + 2 * Fo * G) + 2 * _MIB)

    out = pl.pallas_call(
        kernel,
        out_shape=jax.ShapeDtypeStruct((ngrp, Fo, G), jnp.float32),
        grid=(ngrp,),
        in_specs=[
            pl.BlockSpec((1, K1, GN), lambda t: (t, 0, 0)),   # s_r
            pl.BlockSpec((1, K1, GN), lambda t: (t, 0, 0)),   # s_i
            pl.BlockSpec((1, C, GN), lambda t: (t, 0, 0)),    # X_r
            pl.BlockSpec((1, C, GN), lambda t: (t, 0, 0)),    # X_i
            pl.BlockSpec((K1 * F, C), lambda t: (0, 0)),      # W1 real (stacked)
            pl.BlockSpec((K1 * F, C), lambda t: (0, 0)),      # W1 imag
            pl.BlockSpec((K1 * F, F), lambda t: (0, 0)),      # W2 real
            pl.BlockSpec((K1 * F, F), lambda t: (0, 0)),      # W2 imag
            pl.BlockSpec((Fo, F), lambda t: (0, 0)),          # head W (real)
            pl.BlockSpec((Fo, F), lambda t: (0, 0)),          # head W (imag)
            pl.BlockSpec((Fo, 1), lambda t: (0, 0)),          # head bias
            pl.BlockSpec((GN, G), lambda t: (0, 0)),          # segment-mean mat
        ],
        out_specs=pl.BlockSpec((1, Fo, G), lambda t: (t, 0, 0)),
        compiler_params=pltpu.CompilerParams(
            dimension_semantics=("parallel",),
            vmem_limit_bytes=vmem_bytes),
    )(sr_g, si_g, xr_g, xi_g, w1r, w1i, w2r, w2i, hwr, hwi, hb, mmat)

    out = out.transpose(0, 2, 1).reshape(B, Fo)        # (ngrp, Fo, G) -> (B, Fo)
    return jnp.squeeze(out)                            # matches x.squeeze()


# ----------------------------------------------------------------------------
# Pure-JAX reference (for correctness check)
# ----------------------------------------------------------------------------
def ref_cheb_conv(lr, li, xr, xi, wr, wi):
    sr = lr.sum(-1)                                    # (B, K1, N)
    si = li.sum(-1)
    t1r = jnp.einsum("bkn,bnc,kcf->bknf", sr, xr, wr)
    t2r = jnp.einsum("bkn,bnc,kcf->bknf", si, xi, wi)
    t1i = jnp.einsum("bkn,bnc,kcf->bknf", si, xr, wr)
    t2i = jnp.einsum("bkn,bnc,kcf->bknf", sr, xi, wi)
    return (t1r - t2r).sum(1), (t1i + t2i).sum(1)


def ref_forward(real, imag, lr, li, params, layer=2):
    real, imag = ref_cheb_conv(lr, li, real, imag, params["w1r"], params["w1i"])
    for _ in range(1, layer):
        real, imag = ref_cheb_conv(lr, li, real, imag,
                                   params["w2r"], params["w2i"])
        mask = (real >= 0).astype(real.dtype)
        real, imag = mask * real, mask * imag
    x = jnp.concatenate([real, imag], axis=-1)         # (B, N, 2F)
    N = x.shape[1]
    y = jnp.einsum("bnc,oc->bo", x, params["conv_w"]) / N + params["conv_b"]
    return jnp.squeeze(y)


# ----------------------------------------------------------------------------
if __name__ == "__main__":
    B, N, in_c = 2, 30, 4                              # size=30 nodes (forward default)
    num_filter, K = 2, 2
    K1 = K + 1

    key = jax.random.PRNGKey(0)
    kx, ky, kl1, kl2, kp = jax.random.split(key, 5)

    x_real = jax.random.normal(kx, (B, N, in_c), jnp.float32)
    x_imag = jax.random.normal(ky, (B, N, in_c), jnp.float32)
    lap_real = jax.random.normal(kl1, (B, K1, N, N), jnp.float32) * 0.1
    lap_imag = jax.random.normal(kl2, (B, K1, N, N), jnp.float32) * 0.1

    params = init_params(kp, in_c, num_filter, K)

    fwd = jax.jit(lambda xr, xi, lr, li, p: chebnet_forward(xr, xi, lr, li, p,
                                                            layer=2))
    out = fwd(x_real, x_imag, lap_real, lap_imag, params)
    out = jax.block_until_ready(out)

    ref = ref_forward(x_real, x_imag, lap_real, lap_imag, params, layer=2)
    assert out.shape == ref.shape == (B, num_filter), (out.shape, ref.shape)
    assert jnp.allclose(out, ref, atol=1e-4, rtol=1e-4), (out, ref)

    print("KERNEL_OK")
</pallas_src>

<mosaic_0001>
module attributes {stable_mosaic.version = 11 : i64} {
  func.func @_rowsum_kernel(%arg0: i32, %arg1: i32, %arg2: i32, %arg3: memref<1x3x30x30xf32, #tpu.memory_space<vmem>>, %arg4: memref<1x3x30x30xf32, #tpu.memory_space<vmem>>, %arg5: memref<1x3x30xf32, #tpu.memory_space<vmem>>, %arg6: memref<1x3x30xf32, #tpu.memory_space<vmem>>) attributes {dimension_semantics = [#tpu.dimension_semantics<parallel>, #tpu.dimension_semantics<parallel>, #tpu.dimension_semantics<arbitrary>], iteration_bounds = array<i64: 2, 1, 1>, scalar_prefetch = 0 : i64, scratch_operands = 0 : i64, tpu.core_type = #tpu.core_type<tc>, window_params = [{transform_indices = @transform_0, window_bounds = array<i64: 1, 3, 30, 30>}, {transform_indices = @transform_1, window_bounds = array<i64: 1, 3, 30, 30>}, {transform_indices = @transform_2, window_bounds = array<i64: 1, 3, 30>}, {transform_indices = @transform_3, window_bounds = array<i64: 1, 3, 30>}]} {
    %c0_i32 = arith.constant 0 : i32
    %0 = arith.cmpi eq, %arg2, %c0_i32 : i32
    %1 = arith.extui %0 : i1 to i32
    %c0_i32_0 = arith.constant 0 : i32
    %2 = arith.cmpi ne, %1, %c0_i32_0 : i32
    scf.if %2 {
      %cst_21 = arith.constant 0.000000e+00 : f32
      %21 = vector.broadcast %cst_21 : f32 to vector<1x3x30xf32>
      %c0_22 = arith.constant 0 : index
      %c0_23 = arith.constant 0 : index
      %c0_24 = arith.constant 0 : index
      %22 = vector.load %arg5[%c0_22, %c0_23, %c0_24] : memref<1x3x30xf32, #tpu.memory_space<vmem>>, vector<1x3x30xf32>
      tpu.vector_store %arg5[%c0_22, %c0_23, %c0_24], %21 {strides = array<i32>} : memref<1x3x30xf32, #tpu.memory_space<vmem>>, vector<1x3x30xf32>,
      %cst_25 = arith.constant 0.000000e+00 : f32
      %23 = vector.broadcast %cst_25 : f32 to vector<1x3x30xf32>
      %c0_26 = arith.constant 0 : index
      %c0_27 = arith.constant 0 : index
      %c0_28 = arith.constant 0 : index
      %24 = vector.load %arg6[%c0_26, %c0_27, %c0_28] : memref<1x3x30xf32, #tpu.memory_space<vmem>>, vector<1x3x30xf32>
      tpu.vector_store %arg6[%c0_26, %c0_27, %c0_28], %23 {strides = array<i32>} : memref<1x3x30xf32, #tpu.memory_space<vmem>>, vector<1x3x30xf32>,
    } else {
    }
    %c0 = arith.constant 0 : index
    %c0_1 = arith.constant 0 : index
    %c0_2 = arith.constant 0 : index
    %3 = vector.load %arg5[%c0, %c0_1, %c0_2] : memref<1x3x30xf32, #tpu.memory_space<vmem>>, vector<1x3x30xf32>
    %4 = vector.shape_cast %3 : vector<1x3x30xf32> to vector<3x30xf32>
    %c0_3 = arith.constant 0 : index
    %c0_4 = arith.constant 0 : index
    %c0_5 = arith.constant 0 : index
    %c0_6 = arith.constant 0 : index
    %5 = vector.load %arg3[%c0_3, %c0_4, %c0_5, %c0_6] : memref<1x3x30x30xf32, #tpu.memory_space<vmem>>, vector<1x3x30x30xf32>
    %6 = vector.shape_cast %5 : vector<1x3x30x30xf32> to vector<3x30x30xf32>
    %cst = arith.constant dense<0.000000e+00> : vector<3x30xf32>
    %7 = vector.multi_reduction <add>, %6, %cst [2] : vector<3x30x30xf32> to vector<3x30xf32>
    %8 = arith.addf %4, %7 : vector<3x30xf32>
    %c0_7 = arith.constant 0 : index
    %c0_8 = arith.constant 0 : index
    %c0_9 = arith.constant 0 : index
    %9 = vector.load %arg5[%c0_7, %c0_8, %c0_9] : memref<1x3x30xf32, #tpu.memory_space<vmem>>, vector<1x3x30xf32>
    %10 = vector.shape_cast %9 : vector<1x3x30xf32> to vector<3x30xf32>
    %11 = vector.shape_cast %8 : vector<3x30xf32> to vector<1x3x30xf32>
    tpu.vector_store %arg5[%c0_7, %c0_8, %c0_9], %11 {strides = array<i32>} : memref<1x3x30xf32, #tpu.memory_space<vmem>>, vector<1x3x30xf32>,
    %c0_10 = arith.constant 0 : index
    %c0_11 = arith.constant 0 : index
    %c0_12 = arith.constant 0 : index
    %12 = vector.load %arg6[%c0_10, %c0_11, %c0_12] : memref<1x3x30xf32, #tpu.memory_space<vmem>>, vector<1x3x30xf32>
    %13 = vector.shape_cast %12 : vector<1x3x30xf32> to vector<3x30xf32>
    %c0_13 = arith.constant 0 : index
    %c0_14 = arith.constant 0 : index
    %c0_15 = arith.constant 0 : index
    %c0_16 = arith.constant 0 : index
    %14 = vector.load %arg4[%c0_13, %c0_14, %c0_15, %c0_16] : memref<1x3x30x30xf32, #tpu.memory_space<vmem>>, vector<1x3x30x30xf32>
    %15 = vector.shape_cast %14 : vector<1x3x30x30xf32> to vector<3x30x30xf32>
    %cst_17 = arith.constant dense<0.000000e+00> : vector<3x30xf32>
    %16 = vector.multi_reduction <add>, %15, %cst_17 [2] : vector<3x30x30xf32> to vector<3x30xf32>
    %17 = arith.addf %13, %16 : vector<3x30xf32>
    %c0_18 = arith.constant 0 : index
    %c0_19 = arith.constant 0 : index
    %c0_20 = arith.constant 0 : index
    %18 = vector.load %arg6[%c0_18, %c0_19, %c0_20] : memref<1x3x30xf32, #tpu.memory_space<vmem>>, vector<1x3x30xf32>
    %19 = vector.shape_cast %18 : vector<1x3x30xf32> to vector<3x30xf32>
    %20 = vector.shape_cast %17 : vector<3x30xf32> to vector<1x3x30xf32>
    tpu.vector_store %arg6[%c0_18, %c0_19, %c0_20], %20 {strides = array<i32>} : memref<1x3x30xf32, #tpu.memory_space<vmem>>, vector<1x3x30xf32>,
    return
  }
  func.func @transform_0(%arg0: i32, %arg1: i32, %arg2: i32) -> (i32, i32, i32, i32) {
    %c0_i32 = arith.constant 0 : i32
    %c0_i32_0 = arith.constant 0 : i32
    return %arg0, %c0_i32, %arg1, %arg2 : i32, i32, i32, i32
  }
  func.func @transform_1(%arg0: i32, %arg1: i32, %arg2: i32) -> (i32, i32, i32, i32) {
    %c0_i32 = arith.constant 0 : i32
    %c0_i32_0 = arith.constant 0 : i32
    return %arg0, %c0_i32, %arg1, %arg2 : i32, i32, i32, i32
  }
  func.func @transform_2(%arg0: i32, %arg1: i32, %arg2: i32) -> (i32, i32, i32) {
    %c0_i32 = arith.constant 0 : i32
    %c0_i32_0 = arith.constant 0 : i32
    return %arg0, %c0_i32, %arg1 : i32, i32, i32
  }
  func.func @transform_3(%arg0: i32, %arg1: i32, %arg2: i32) -> (i32, i32, i32) {
    %c0_i32 = arith.constant 0 : i32
    %c0_i32_0 = arith.constant 0 : i32
    return %arg0, %c0_i32, %arg1 : i32, i32, i32
  }
}

module attributes {stable_mosaic.version = 11 : i64} {
  func.func @_fused_chebnet_kernel(%arg0: i32, %arg1: memref<1x3x60xf32, #tpu.memory_space<vmem>>, %arg2: memref<1x3x60xf32, #tpu.memory_space<vmem>>, %arg3: memref<1x4x60xf32, #tpu.memory_space<vmem>>, %arg4: memref<1x4x60xf32, #tpu.memory_space<vmem>>, %arg5: memref<6x4xf32, #tpu.memory_space<vmem>>, %arg6: memref<6x4xf32, #tpu.memory_space<vmem>>, %arg7: memref<6x2xf32, #tpu.memory_space<vmem>>, %arg8: memref<6x2xf32, #tpu.memory_space<vmem>>, %arg9: memref<2x2xf32, #tpu.memory_space<vmem>>, %arg10: memref<2x2xf32, #tpu.memory_space<vmem>>, %arg11: memref<2x1xf32, #tpu.memory_space<vmem>>, %arg12: memref<60x2xf32, #tpu.memory_space<vmem>>, %arg13: memref<1x2x2xf32, #tpu.memory_space<vmem>>) attributes {dimension_semantics = [#tpu.dimension_semantics<parallel>], iteration_bounds = array<i64: 1>, scalar_prefetch = 0 : i64, scratch_operands = 0 : i64, tpu.core_type = #tpu.core_type<tc>, window_params = [{transform_indices = @transform_0, window_bounds = array<i64: 1, 3, 60>}, {transform_indices = @transform_1, window_bounds = array<i64: 1, 3, 60>}, {transform_indices = @transform_2, window_bounds = array<i64: 1, 4, 60>}, {transform_indices = @transform_3, window_bounds = array<i64: 1, 4, 60>}, {pipeline_mode = #tpu.pipeline_mode<synchronous>, transform_indices = @transform_4, window_bounds = array<i64: 6, 4>}, {pipeline_mode = #tpu.pipeline_mode<synchronous>, transform_indices = @transform_5, window_bounds = array<i64: 6, 4>}, {pipeline_mode = #tpu.pipeline_mode<synchronous>, transform_indices = @transform_6, window_bounds = array<i64: 6, 2>}, {pipeline_mode = #tpu.pipeline_mode<synchronous>, transform_indices = @transform_7, window_bounds = array<i64: 6, 2>}, {pipeline_mode = #tpu.pipeline_mode<synchronous>, transform_indices = @transform_8, window_bounds = array<i64: 2, 2>}, {pipeline_mode = #tpu.pipeline_mode<synchronous>, transform_indices = @transform_9, window_bounds = array<i64: 2, 2>}, {pipeline_mode = #tpu.pipeline_mode<synchronous>, transform_indices = @transform_10, window_bounds = array<i64: 2, 1>}, {pipeline_mode = #tpu.pipeline_mode<synchronous>, transform_indices = @transform_11, window_bounds = array<i64: 60, 2>}, {transform_indices = @transform_12, window_bounds = array<i64: 1, 2, 2>}]} {
    %c0 = arith.constant 0 : index
    %c0_0 = arith.constant 0 : index
    %c0_1 = arith.constant 0 : index
    %0 = vector.load %arg1[%c0, %c0_0, %c0_1] : memref<1x3x60xf32, #tpu.memory_space<vmem>>, vector<1x3x60xf32>
    %1 = vector.shape_cast %0 : vector<1x3x60xf32> to vector<3x60xf32>
    %c0_2 = arith.constant 0 : index
    %c0_3 = arith.constant 0 : index
    %c0_4 = arith.constant 0 : index
    %2 = vector.load %arg2[%c0_2, %c0_3, %c0_4] : memref<1x3x60xf32, #tpu.memory_space<vmem>>, vector<1x3x60xf32>
    %3 = vector.shape_cast %2 : vector<1x3x60xf32> to vector<3x60xf32>
    %c0_5 = arith.constant 0 : index
    %c0_6 = arith.constant 0 : index
    %c0_7 = arith.constant 0 : index
    %4 = vector.load %arg3[%c0_5, %c0_6, %c0_7] : memref<1x4x60xf32, #tpu.memory_space<vmem>>, vector<1x4x60xf32>
    %5 = vector.shape_cast %4 : vector<1x4x60xf32> to vector<4x60xf32>
    %c0_8 = arith.constant 0 : index
    %c0_9 = arith.constant 0 : index
    %c0_10 = arith.constant 0 : index
    %6 = vector.load %arg4[%c0_8, %c0_9, %c0_10] : memref<1x4x60xf32, #tpu.memory_space<vmem>>, vector<1x4x60xf32>
    %7 = vector.shape_cast %6 : vector<1x4x60xf32> to vector<4x60xf32>
    %c0_11 = arith.constant 0 : index
    %c0_12 = arith.constant 0 : index
    %8 = vector.load %arg5[%c0_11, %c0_12] : memref<6x4xf32, #tpu.memory_space<vmem>>, vector<6x4xf32>
    %c0_13 = arith.constant 0 : index
    %c0_14 = arith.constant 0 : index
    %9 = vector.load %arg6[%c0_13, %c0_14] : memref<6x4xf32, #tpu.memory_space<vmem>>, vector<6x4xf32>
    %cst = arith.constant dense<0.000000e+00> : vector<6x60xf32>
    %10 = tpu.matmul %8, %5, %cst {dimension_numbers = #tpu.dot_dimension_numbers<[1], [0], [0], [1], [0, 0, 1, 1], [], []>} : vector<6x4xf32>, vector<4x60xf32>, vector<6x60xf32> -> vector<6x60xf32>
    %cst_15 = arith.constant dense<0.000000e+00> : vector<6x60xf32>
    %11 = tpu.matmul %9, %7, %cst_15 {dimension_numbers = #tpu.dot_dimension_numbers<[1], [0], [0], [1], [0, 0, 1, 1], [], []>} : vector<6x4xf32>, vector<4x60xf32>, vector<6x60xf32> -> vector<6x60xf32>
    %12 = vector.extract_strided_slice %10 {offsets = [0, 0], sizes = [2, 60], strides = [1, 1]} : vector<6x60xf32> to vector<2x60xf32>
    %13 = vector.extract_strided_slice %11 {offsets = [0, 0], sizes = [2, 60], strides = [1, 1]} : vector<6x60xf32> to vector<2x60xf32>
    %14 = vector.extract_strided_slice %1 {offsets = [0, 0], sizes = [1, 60], strides = [1, 1]} : vector<3x60xf32> to vector<1x60xf32>
    %15 = vector.extract_strided_slice %3 {offsets = [0, 0], sizes = [1, 60], strides = [1, 1]} : vector<3x60xf32> to vector<1x60xf32>
    %16 = vector.broadcast %14 : vector<1x60xf32> to vector<2x60xf32>
    %17 = arith.mulf %16, %12 : vector<2x60xf32>
    %18 = vector.broadcast %15 : vector<1x60xf32> to vector<2x60xf32>
    %19 = arith.mulf %18, %13 : vector<2x60xf32>
    %20 = arith.subf %17, %19 : vector<2x60xf32>
    %21 = vector.broadcast %15 : vector<1x60xf32> to vector<2x60xf32>
    %22 = arith.mulf %21, %12 : vector<2x60xf32>
    %23 = vector.broadcast %14 : vector<1x60xf32> to vector<2x60xf32>
    %24 = arith.mulf %23, %13 : vector<2x60xf32>
    %25 = arith.addf %22, %24 : vector<2x60xf32>
    %26 = vector.extract_strided_slice %10 {offsets = [2, 0], sizes = [2, 60], strides = [1, 1]} : vector<6x60xf32> to vector<2x60xf32>
    %27 = vector.extract_strided_slice %11 {offsets = [2, 0], sizes = [2, 60], strides = [1, 1]} : vector<6x60xf32> to vector<2x60xf32>
    %28 = vector.extract_strided_slice %1 {offsets = [1, 0], sizes = [1, 60], strides = [1, 1]} : vector<3x60xf32> to vector<1x60xf32>
    %29 = vector.extract_strided_slice %3 {offsets = [1, 0], sizes = [1, 60], strides = [1, 1]} : vector<3x60xf32> to vector<1x60xf32>
    %30 = vector.broadcast %28 : vector<1x60xf32> to vector<2x60xf32>
    %31 = arith.mulf %30, %26 : vector<2x60xf32>
    %32 = vector.broadcast %29 : vector<1x60xf32> to vector<2x60xf32>
    %33 = arith.mulf %32, %27 : vector<2x60xf32>
    %34 = arith.subf %31, %33 : vector<2x60xf32>
    %35 = vector.broadcast %29 : vector<1x60xf32> to vector<2x60xf32>
    %36 = arith.mulf %35, %26 : vector<2x60xf32>
    %37 = vector.broadcast %28 : vector<1x60xf32> to vector<2x60xf32>
    %38 = arith.mulf %37, %27 : vector<2x60xf32>
    %39 = arith.addf %36, %38 : vector<2x60xf32>
    %40 = arith.addf %20, %34 : vector<2x60xf32>
    %41 = arith.addf %25, %39 : vector<2x60xf32>
    %42 = vector.extract_strided_slice %10 {offsets = [4, 0], sizes = [2, 60], strides = [1, 1]} : vector<6x60xf32> to vector<2x60xf32>
    %43 = vector.extract_strided_slice %11 {offsets = [4, 0], sizes = [2, 60], strides = [1, 1]} : vector<6x60xf32> to vector<2x60xf32>
    %44 = vector.extract_strided_slice %1 {offsets = [2, 0], sizes = [1, 60], strides = [1, 1]} : vector<3x60xf32> to vector<1x60xf32>
    %45 = vector.extract_strided_slice %3 {offsets = [2, 0], sizes = [1, 60], strides = [1, 1]} : vector<3x60xf32> to vector<1x60xf32>
    %46 = vector.broadcast %44 : vector<1x60xf32> to vector<2x60xf32>
    %47 = arith.mulf %46, %42 : vector<2x60xf32>
    %48 = vector.broadcast %45 : vector<1x60xf32> to vector<2x60xf32>
    %49 = arith.mulf %48, %43 : vector<2x60xf32>
    %50 = arith.subf %47, %49 : vector<2x60xf32>
    %51 = vector.broadcast %45 : vector<1x60xf32> to vector<2x60xf32>
    %52 = arith.mulf %51, %42 : vector<2x60xf32>
    %53 = vector.broadcast %44 : vector<1x60xf32> to vector<2x60xf32>
    %54 = arith.mulf %53, %43 : vector<2x60xf32>
    %55 = arith.addf %52, %54 : vector<2x60xf32>
    %56 = arith.addf %40, %50 : vector<2x60xf32>
    %57 = arith.addf %41, %55 : vector<2x60xf32>
    %c0_16 = arith.constant 0 : index
    %c0_17 = arith.constant 0 : index
    %58 = vector.load %arg7[%c0_16, %c0_17] : memref<6x2xf32, #tpu.memory_space<vmem>>, vector<6x2xf32>
    %c0_18 = arith.constant 0 : index
    %c0_19 = arith.constant 0 : index
    %59 = vector.load %arg8[%c0_18, %c0_19] : memref<6x2xf32, #tpu.memory_space<vmem>>, vector<6x2xf32>
    %cst_20 = arith.constant dense<0.000000e+00> : vector<6x60xf32>
    %60 = tpu.matmul %58, %56, %cst_20 {dimension_numbers = #tpu.dot_dimension_numbers<[1], [0], [0], [1], [0, 0, 1, 1], [], []>} : vector<6x2xf32>, vector<2x60xf32>, vector<6x60xf32> -> vector<6x60xf32>
    %cst_21 = arith.constant dense<0.000000e+00> : vector<6x60xf32>
    %61 = tpu.matmul %59, %57, %cst_21 {dimension_numbers = #tpu.dot_dimension_numbers<[1], [0], [0], [1], [0, 0, 1, 1], [], []>} : vector<6x2xf32>, vector<2x60xf32>, vector<6x60xf32> -> vector<6x60xf32>
    %62 = vector.extract_strided_slice %60 {offsets = [0, 0], sizes = [2, 60], strides = [1, 1]} : vector<6x60xf32> to vector<2x60xf32>
    %63 = vector.extract_strided_slice %61 {offsets = [0, 0], sizes = [2, 60], strides = [1, 1]} : vector<6x60xf32> to vector<2x60xf32>
    %64 = vector.extract_strided_slice %1 {offsets = [0, 0], sizes = [1, 60], strides = [1, 1]} : vector<3x60xf32> to vector<1x60xf32>
    %65 = vector.extract_strided_slice %3 {offsets = [0, 0], sizes = [1, 60], strides = [1, 1]} : vector<3x60xf32> to vector<1x60xf32>
    %66 = vector.broadcast %64 : vector<1x60xf32> to vector<2x60xf32>
    %67 = arith.mulf %66, %62 : vector<2x60xf32>
    %68 = vector.broadcast %65 : vector<1x60xf32> to vector<2x60xf32>
    %69 = arith.mulf %68, %63 : vector<2x60xf32>
    %70 = arith.subf %67, %69 : vector<2x60xf32>
    %71 = vector.broadcast %65 : vector<1x60xf32> to vector<2x60xf32>
    %72 = arith.mulf %71, %62 : vector<2x60xf32>
    %73 = vector.broadcast %64 : vector<1x60xf32> to vector<2x60xf32>
    %74 = arith.mulf %73, %63 : vector<2x60xf32>
    %75 = arith.addf %72, %74 : vector<2x60xf32>
    %76 = vector.extract_strided_slice %60 {offsets = [2, 0], sizes = [2, 60], strides = [1, 1]} : vector<6x60xf32> to vector<2x60xf32>
    %77 = vector.extract_strided_slice %61 {offsets = [2, 0], sizes = [2, 60], strides = [1, 1]} : vector<6x60xf32> to vector<2x60xf32>
    %78 = vector.extract_strided_slice %1 {offsets = [1, 0], sizes = [1, 60], strides = [1, 1]} : vector<3x60xf32> to vector<1x60xf32>
    %79 = vector.extract_strided_slice %3 {offsets = [1, 0], sizes = [1, 60], strides = [1, 1]} : vector<3x60xf32> to vector<1x60xf32>
    %80 = vector.broadcast %78 : vector<1x60xf32> to vector<2x60xf32>
    %81 = arith.mulf %80, %76 : vector<2x60xf32>
    %82 = vector.broadcast %79 : vector<1x60xf32> to vector<2x60xf32>
    %83 = arith.mulf %82, %77 : vector<2x60xf32>
    %84 = arith.subf %81, %83 : vector<2x60xf32>
    %85 = vector.broadcast %79 : vector<1x60xf32> to vector<2x60xf32>
    %86 = arith.mulf %85, %76 : vector<2x60xf32>
    %87 = vector.broadcast %78 : vector<1x60xf32> to vector<2x60xf32>
    %88 = arith.mulf %87, %77 : vector<2x60xf32>
    %89 = arith.addf %86, %88 : vector<2x60xf32>
    %90 = arith.addf %70, %84 : vector<2x60xf32>
    %91 = arith.addf %75, %89 : vector<2x60xf32>
    %92 = vector.extract_strided_slice %60 {offsets = [4, 0], sizes = [2, 60], strides = [1, 1]} : vector<6x60xf32> to vector<2x60xf32>
    %93 = vector.extract_strided_slice %61 {offsets = [4, 0], sizes = [2, 60], strides = [1, 1]} : vector<6x60xf32> to vector<2x60xf32>
    %94 = vector.extract_strided_slice %1 {offsets = [2, 0], sizes = [1, 60], strides = [1, 1]} : vector<3x60xf32> to vector<1x60xf32>
    %95 = vector.extract_strided_slice %3 {offsets = [2, 0], sizes = [1, 60], strides = [1, 1]} : vector<3x60xf32> to vector<1x60xf32>
    %96 = vector.broadcast %94 : vector<1x60xf32> to vector<2x60xf32>
    %97 = arith.mulf %96, %92 : vector<2x60xf32>
    %98 = vector.broadcast %95 : vector<1x60xf32> to vector<2x60xf32>
    %99 = arith.mulf %98, %93 : vector<2x60xf32>
    %100 = arith.subf %97, %99 : vector<2x60xf32>
    %101 = vector.broadcast %95 : vector<1x60xf32> to vector<2x60xf32>
    %102 = arith.mulf %101, %92 : vector<2x60xf32>
    %103 = vector.broadcast %94 : vector<1x60xf32> to vector<2x60xf32>
    %104 = arith.mulf %103, %93 : vector<2x60xf32>
    %105 = arith.addf %102, %104 : vector<2x60xf32>
    %106 = arith.addf %90, %100 : vector<2x60xf32>
    %107 = arith.addf %91, %105 : vector<2x60xf32>
    %cst_22 = arith.constant 0.000000e+00 : f32
    %108 = vector.broadcast %cst_22 : f32 to vector<2x60xf32>
    %109 = arith.maximumf %106, %108 : vector<2x60xf32>
    %cst_23 = arith.constant 0.000000e+00 : f32
    %110 = vector.broadcast %cst_23 : f32 to vector<2x60xf32>
    %111 = arith.cmpf oge, %106, %110 : vector<2x60xf32>
    %cst_24 = arith.constant 0.000000e+00 : f32
    %112 = vector.broadcast %cst_24 : f32 to vector<2x60xf32>
    %113 = arith.select %111, %107, %112 : vector<2x60xi1>, vector<2x60xf32>
    %c0_25 = arith.constant 0 : index
    %c0_26 = arith.constant 0 : index
    %114 = vector.load %arg9[%c0_25, %c0_26] : memref<2x2xf32, #tpu.memory_space<vmem>>, vector<2x2xf32>
    %cst_27 = arith.constant dense<0.000000e+00> : vector<2x60xf32>
    %115 = tpu.matmul %114, %109, %cst_27 {dimension_numbers = #tpu.dot_dimension_numbers<[1], [0], [0], [1], [0, 0, 1, 1], [], []>} : vector<2x2xf32>, vector<2x60xf32>, vector<2x60xf32> -> vector<2x60xf32>
    %c0_28 = arith.constant 0 : index
    %c0_29 = arith.constant 0 : index
    %116 = vector.load %arg10[%c0_28, %c0_29] : memref<2x2xf32, #tpu.memory_space<vmem>>, vector<2x2xf32>
    %cst_30 = arith.constant dense<0.000000e+00> : vector<2x60xf32>
    %117 = tpu.matmul %116, %113, %cst_30 {dimension_numbers = #tpu.dot_dimension_numbers<[1], [0], [0], [1], [0, 0, 1, 1], [], []>} : vector<2x2xf32>, vector<2x60xf32>, vector<2x60xf32> -> vector<2x60xf32>
    %118 = arith.addf %115, %117 : vector<2x60xf32>
    %c0_31 = arith.constant 0 : index
    %c0_32 = arith.constant 0 : index
    %119 = vector.load %arg12[%c0_31, %c0_32] : memref<60x2xf32, #tpu.memory_space<vmem>>, vector<60x2xf32>
    %cst_33 = arith.constant dense<0.000000e+00> : vector<2x2xf32>
    %120 = tpu.matmul %118, %119, %cst_33 {dimension_numbers = #tpu.dot_dimension_numbers<[1], [0], [0], [1], [0, 0, 1, 1], [], []>} : vector<2x60xf32>, vector<60x2xf32>, vector<2x2xf32> -> vector<2x2xf32>
    %c0_34 = arith.constant 0 : index
    %c0_35 = arith.constant 0 : index
    %121 = vector.load %arg11[%c0_34, %c0_35] : memref<2x1xf32, #tpu.memory_space<vmem>>, vector<2x1xf32>
    %122 = vector.broadcast %121 : vector<2x1xf32> to vector<2x2xf32>
    %123 = arith.addf %120, %122 : vector<2x2xf32>
    %c0_36 = arith.constant 0 : index
    %c0_37 = arith.constant 0 : index
    %c0_38 = arith.constant 0 : index
    %124 = vector.load %arg13[%c0_36, %c0_37, %c0_38] : memref<1x2x2xf32, #tpu.memory_space<vmem>>, vector<1x2x2xf32>
    %125 = vector.shape_cast %124 : vector<1x2x2xf32> to vector<2x2xf32>
    %126 = vector.shape_cast %123 : vector<2x2xf32> to vector<1x2x2xf32>
    tpu.vector_store %arg13[%c0_36, %c0_37, %c0_38], %126 {strides = array<i32>} : memref<1x2x2xf32, #tpu.memory_space<vmem>>, vector<1x2x2xf32>,
    return
  }
  func.func @transform_0(%arg0: i32) -> (i32, i32, i32) {
    %c0_i32 = arith.constant 0 : i32
    %c0_i32_0 = arith.constant 0 : i32
    %c0_i32_1 = arith.constant 0 : i32
    return %arg0, %c0_i32, %c0_i32_0 : i32, i32, i32
  }
  func.func @transform_1(%arg0: i32) -> (i32, i32, i32) {
    %c0_i32 = arith.constant 0 : i32
    %c0_i32_0 = arith.constant 0 : i32
    %c0_i32_1 = arith.constant 0 : i32
    return %arg0, %c0_i32, %c0_i32_0 : i32, i32, i32
  }
  func.func @transform_2(%arg0: i32) -> (i32, i32, i32) {
    %c0_i32 = arith.constant 0 : i32
    %c0_i32_0 = arith.constant 0 : i32
    %c0_i32_1 = arith.constant 0 : i32
    return %arg0, %c0_i32, %c0_i32_0 : i32, i32, i32
  }
  func.func @transform_3(%arg0: i32) -> (i32, i32, i32) {
    %c0_i32 = arith.constant 0 : i32
    %c0_i32_0 = arith.constant 0 : i32
    %c0_i32_1 = arith.constant 0 : i32
    return %arg0, %c0_i32, %c0_i32_0 : i32, i32, i32
  }
  func.func @transform_4(%arg0: i32) -> (i32, i32) {
    %c0_i32 = arith.constant 0 : i32
    %c0_i32_0 = arith.constant 0 : i32
    %c0_i32_1 = arith.constant 0 : i32
    return %c0_i32, %c0_i32_0 : i32, i32
  }
  func.func @transform_5(%arg0: i32) -> (i32, i32) {
    %c0_i32 = arith.constant 0 : i32
    %c0_i32_0 = arith.constant 0 : i32
    %c0_i32_1 = arith.constant 0 : i32
    return %c0_i32, %c0_i32_0 : i32, i32
  }
  func.func @transform_6(%arg0: i32) -> (i32, i32) {
    %c0_i32 = arith.constant 0 : i32
    %c0_i32_0 = arith.constant 0 : i32
    %c0_i32_1 = arith.constant 0 : i32
    return %c0_i32, %c0_i32_0 : i32, i32
  }
  func.func @transform_7(%arg0: i32) -> (i32, i32) {
    %c0_i32 = arith.constant 0 : i32
    %c0_i32_0 = arith.constant 0 : i32
    %c0_i32_1 = arith.constant 0 : i32
    return %c0_i32, %c0_i32_0 : i32, i32
  }
  func.func @transform_8(%arg0: i32) -> (i32, i32) {
    %c0_i32 = arith.constant 0 : i32
    %c0_i32_0 = arith.constant 0 : i32
    %c0_i32_1 = arith.constant 0 : i32
    return %c0_i32, %c0_i32_0 : i32, i32
  }
  func.func @transform_9(%arg0: i32) -> (i32, i32) {
    %c0_i32 = arith.constant 0 : i32
    %c0_i32_0 = arith.constant 0 : i32
    %c0_i32_1 = arith.constant 0 : i32
    return %c0_i32, %c0_i32_0 : i32, i32
  }
  func.func @transform_10(%arg0: i32) -> (i32, i32) {
    %c0_i32 = arith.constant 0 : i32
    %c0_i32_0 = arith.constant 0 : i32
    %c0_i32_1 = arith.constant 0 : i32
    return %c0_i32, %c0_i32_0 : i32, i32
  }
  func.func @transform_11(%arg0: i32) -> (i32, i32) {
    %c0_i32 = arith.constant 0 : i32
    %c0_i32_0 = arith.constant 0 : i32
    %c0_i32_1 = arith.constant 0 : i32
    return %c0_i32, %c0_i32_0 : i32, i32
  }
  func.func @transform_12(%arg0: i32) -> (i32, i32, i32) {
    %c0_i32 = arith.constant 0 : i32
    %c0_i32_0 = arith.constant 0 : i32
    %c0_i32_1 = arith.constant 0 : i32
    return %arg0, %c0_i32, %c0_i32_0 : i32, i32, i32
  }
}

</mosaic_0001>

<llo_original>
// kernel: eq.8
$region0: #{eq.8}
  %s0 = inlined_call_operand.vmem [shape: s32[2,30], index: 0, kind: input, shape index: {}]
  %s1 = inlined_call_operand.vmem [shape: s32[60], index: 1, kind: output, shape index: {}]
  $region1: #{eq.8} parent=0
    #allocation0 [shape = 'u8[4096]{0}', space=vmem, size = 0x1000, scoped, tag = 'scoped mem for output reshape']
    #allocation1 [shape = 'u8[4096]{0}', space=vmem, size = 0x1000, scoped, tag = 'scoped mem for input reshape']
    %s3 = sshllo.u32 0, 2
    %v4 = vld [vmem:[%s0] sm:%s3]
    %5 = vst [vmem:[#allocation1] sm:%s3] %v4
    %v6 = vld [vmem:[#allocation1] sm:$0x1]
    %vm7 = vcmask 244736
    %8 = vst.msk [vmem:[#allocation0] sm:$0x1] %vm7, %v6
    %s9 = scalar_lea.vmem [#allocation1], 1
    %v10 = vld [vmem:[%s9] sm:$0x1]
    %11 = vrot.lane.b32.xlu0 %v10, 30
    %v12 = vpop.permute.xlu0 %11
    %vm13 = vcmask 490736
    %14 = vst.msk [vmem:[#allocation0] sm:$0x1] %vm13, %v12
    %s16 = sshllo.u32 0, 1
    %v18 = vld [vmem:[#allocation0] sm:%s16]
    %s19 = sshllo.u32 0, 1
    %20 = vst [vmem:[%s1] sm:%s19] %v18

// kernel: _lambda_.2
$region0: #{_lambda_.2}
  #allocation0 [shape = 'u32[]', space=smem, size = 0x4, offset = 0x4, fixed_abs, tag = 'smem constant byte address 0x4 - core index']
  #allocation1 [shape = 'u32[144,128]{1,0:T(1,128)}', space=vmem, size = 0x12000, scoped, tag = 'internal scratch']
  %s0 = inlined_call_operand.vmem [shape: f32[2,3,30,30], index: 0, kind: input, shape index: {}]
  %s1 = inlined_call_operand.vmem [shape: f32[2,3,30,30], index: 1, kind: input, shape index: {}]
  %s2 = inlined_call_operand.vmem [shape: f32[2,3,30], index: 2, kind: output, shape index: {0}]
  %s3 = inlined_call_operand.vmem [shape: f32[2,3,30], index: 3, kind: output, shape index: {1}]
  %4 = xla_tuple %s2, %s3
  %s5 = sld [smem:[#allocation0]]
  $region53: #{_lambda_.2} parent=0
    _
  %s7 = ssub.s32 1, %s5
  %s8 = scalar_select 0, %s7, %s5
  loop: start=0, step=1, limit=4
  $region2: #{_lambda_.2} parent=0 // loop_pre_header
    _
  $region3: #{_lambda_.2} parent=0 // loop_header
    %s10 = sphi 0, %s14
    %p11 = scmp.ge.s32.totalorder %s10, 4
    %s17 = sphi 0, %s36
    %s18 = sphi 0, %s32
    %s19 = sphi 0, %s28
    %s20 = sphi 0, %s17
    %s21 = sphi 0, %s18
    %s22 = sphi 0, %s19
    %s23 = sphi 0, %s20
    %s24 = sphi 0, %s21
    %s25 = sphi 0, %s22
    %s43 = sphi 0, %s45
    %s46 = sphi 0, %s43
    %s47 = sphi 0, %s46
    %s63 = sphi 0, %s47
    %s73 = sphi 0, %s75
    %s76 = sphi 0, %s73
    %s77 = sphi 0, %s76
    %s93 = sphi 0, %s77
    %s101 = sphi 0, %s103
    %s104 = sphi 0, %s101
    %s105 = sphi 0, %s104
    %s121 = sphi 0, %s105
    %s129 = sphi 0, %s131
    %s132 = sphi 0, %s129
    %s133 = sphi 0, %s132
    %s149 = sphi 0, %s133
  $region4: #{_lambda_.2} parent=0 // loop_header_branch
    %13 = sbr.rel (%p11) target = $region8
  $region5: #{_lambda_.2} parent=0 // loop_body
    %s15 = ssub.s32 %s10, 1
    %s16 = ssub.s32 %s10, 2
    %s26 = sadd.s32 1, %s19
    %p27 = scmp.ge.s32.totalorder %s26, 1
    %s28 = scalar_select %p27, 0, %s26
    %s29 = sadd.s32 1, %s18
    %s30 = scalar_select %p27, %s29, %s18
    %p31 = scmp.ge.s32.totalorder %s30, 1
    %s32 = scalar_select %p31, 0, %s30
    %s33 = sadd.s32 1, %s17
    %s34 = scalar_select %p31, %s33, %s17
    %p35 = scmp.ge.s32.totalorder %s34, 2
    %s36 = scalar_select %p35, 0, %s34
    %s37 = ssub.s32 %s17, %s36
    %s38 = ssub.s32 %s18, %s32
    %s39 = sor.u32 %s37, %s38
    %s40 = ssub.s32 %s19, %s28
    %s41 = sor.u32 %s39, %s40
    %p42 = scmp.eq.s32.totalorder %s41, 0
    %s44 = sadd.s32 %s43, 1
    %s45 = scalar_select %p42, %s43, %s44
    %p48 = pneg %p42
    %p49 = scmp.eq.s32.totalorder %s10, 1
    %p50 = por %p48, %p49
    %p51 = scmp.ne.s32.totalorder %s43, %s46
    %p52 = scmp.eq.s32.totalorder %s10, 0
    %p53 = por %p51, %p52
    %p54 = scmp.ne.s32.totalorder %s43, %s46
    %p55 = scmp.eq.s32.totalorder %s15, 1
    %p56 = por %p54, %p55
    %p57 = scmp.ne.s32.totalorder %s46, %s47
    %p58 = scmp.eq.s32.totalorder %s15, 0
    %p59 = por %p57, %p58
    %p60 = scmp.ne.s32.totalorder %s46, %s47
    %p61 = scmp.eq.s32.totalorder %s16, 1
    %p62 = por %p60, %p61
    %p64 = scmp.ne.s32.totalorder %s47, %s63
    %p65 = scmp.eq.s32.totalorder %s16, 0
    %p66 = por %p64, %p65
    %s67 = ssub.s32 %s17, %s36
    %s68 = ssub.s32 %s18, %s32
    %s69 = sor.u32 %s67, %s68
    %s70 = ssub.s32 %s19, %s28
    %s71 = sor.u32 %s69, %s70
    %p72 = scmp.eq.s32.totalorder %s71, 0
    %s74 = sadd.s32 %s73, 1
    %s75 = scalar_select %p72, %s73, %s74
    %p78 = pneg %p72
    %p79 = scmp.eq.s32.totalorder %s10, 1
    %p80 = por %p78, %p79
    %p81 = scmp.ne.s32.totalorder %s73, %s76
    %p82 = scmp.eq.s32.totalorder %s10, 0
    %p83 = por %p81, %p82
    %p84 = scmp.ne.s32.totalorder %s73, %s76
    %p85 = scmp.eq.s32.totalorder %s15, 1
    %p86 = por %p84, %p85
    %p87 = scmp.ne.s32.totalorder %s76, %s77
    %p88 = scmp.eq.s32.totalorder %s15, 0
    %p89 = por %p87, %p88
    %p90 = scmp.ne.s32.totalorder %s76, %s77
    %p91 = scmp.eq.s32.totalorder %s16, 1
    %p92 = por %p90, %p91
    %p94 = scmp.ne.s32.totalorder %s77, %s93
    %p95 = scmp.eq.s32.totalorder %s16, 0
    %p96 = por %p94, %p95
    %s97 = ssub.s32 %s17, %s36
    %s98 = ssub.s32 %s18, %s32
    %s99 = sor.u32 %s97, %s98
    %p100 = scmp.eq.s32.totalorder %s99, 0
    %s102 = sadd.s32 %s101, 1
    %s103 = scalar_select %p100, %s101, %s102
    %p106 = pneg %p100
    %p107 = scmp.eq.s32.totalorder %s10, 1
    %p108 = por %p106, %p107
    %p109 = scmp.ne.s32.totalorder %s101, %s104
    %p110 = scmp.eq.s32.totalorder %s10, 0
    %p111 = por %p109, %p110
    %p112 = scmp.ne.s32.totalorder %s101, %s104
    %p113 = scmp.eq.s32.totalorder %s15, 1
    %p114 = por %p112, %p113
    %p115 = scmp.ne.s32.totalorder %s104, %s105
    %p116 = scmp.eq.s32.totalorder %s15, 0
    %p117 = por %p115, %p116
    %p118 = scmp.ne.s32.totalorder %s104, %s105
    %p119 = scmp.eq.s32.totalorder %s16, 1
    %p120 = por %p118, %p119
    %p122 = scmp.ne.s32.totalorder %s105, %s121
    %p123 = scmp.eq.s32.totalorder %s16, 0
    %p124 = por %p122, %p123
    %s125 = ssub.s32 %s17, %s36
    %s126 = ssub.s32 %s18, %s32
    %s127 = sor.u32 %s125, %s126
    %p128 = scmp.eq.s32.totalorder %s127, 0
    %s130 = sadd.s32 %s129, 1
    %s131 = scalar_select %p128, %s129, %s130
    %p134 = pneg %p128
    %p135 = scmp.eq.s32.totalorder %s10, 1
    %p136 = por %p134, %p135
    %p137 = scmp.ne.s32.totalorder %s129, %s132
    %p138 = scmp.eq.s32.totalorder %s10, 0
    %p139 = por %p137, %p138
    %p140 = scmp.ne.s32.totalorder %s129, %s132
    %p141 = scmp.eq.s32.totalorder %s15, 1
    %p142 = por %p140, %p141
    %p143 = scmp.ne.s32.totalorder %s132, %s133
    %p144 = scmp.eq.s32.totalorder %s15, 0
    %p145 = por %p143, %p144
    %p146 = scmp.ne.s32.totalorder %s132, %s133
    %p147 = scmp.eq.s32.totalorder %s16, 1
    %p148 = por %p146, %p147
    %p150 = scmp.ne.s32.totalorder %s133, %s149
    %p151 = scmp.eq.s32.totalorder %s16, 0
    %p152 = por %p150, %p151
    %p153 = scmp.le.s32.totalorder 1, %s10
    %p154 = scmp.lt.s32.totalorder %s10, 3
    %p155 = pnand %p153, %p154
    %p156 = pneg %p155
    // Predicated region
    $region9: #{_lambda_.2} parent=5 // pred_check
      _
    $region10: #{_lambda_.2} parent=5 // pred_check_branch
      %158 = sbr.rel (%p155) target = $region12
    $region11: #{_lambda_.2} parent=5 // pred_region
      %s159 = ssub.s32 %s10, 1
    $region12: #{_lambda_.2} parent=5 // pred_fallthru
      _
    %p160 = scmp.lt.s32.totalorder %s10, 2
    // Predicated region
    $region13: #{_lambda_.2} parent=5 // pred_check
      %p161 = pneg %p160
    $region14: #{_lambda_.2} parent=5 // pred_check_branch
      %163 = sbr.rel (%p161) target = $region16
    $region15: #{_lambda_.2} parent=5 // pred_region
      // Predicated region
      $region17: #{_lambda_.2} parent=15 // pred_check
        %p164 = pneg %p53
      $region18: #{_lambda_.2} parent=15 // pred_check_branch
        %166 = sbr.rel (%p164) target = $region20
      $region19: #{_lambda_.2} parent=15 // pred_region
        %s167 = smul.u32 4, %s18
        %p168 = scmp.lt.s32.totalorder %s17, 1
        %s169 = scalar_select %p168, %s17, 1
        %p170 = scmp.lt.s32.totalorder %s167, 3
        %s171 = scalar_select %p170, %s167, 3
        %p172 = scmp.lt.s32.totalorder %s19, 0
        %s173 = scalar_select %p172, %s19, 0
        %s174 = sadd.s32 %s173, %s171
        %s175 = smul.addr %s169, 12
        %s176 = sadd.s32 %s174, %s175
        %s177 = smul.addr %s176, 8
        %s178 = scalar_lea.vmem %s0, %s177
        %s179 = smul.u32 4, %s18
      $region20: #{_lambda_.2} parent=15 // pred_fallthru
        _
      // Predicated region
      $region21: #{_lambda_.2} parent=15 // pred_check
        %p180 = pneg %p83
      $region22: #{_lambda_.2} parent=15 // pred_check_branch
        %182 = sbr.rel (%p180) target = $region24
      $region23: #{_lambda_.2} parent=15 // pred_region
        %s183 = smul.u32 4, %s18
        %p184 = scmp.lt.s32.totalorder %s17, 1
        %s185 = scalar_select %p184, %s17, 1
        %p186 = scmp.lt.s32.totalorder %s183, 3
        %s187 = scalar_select %p186, %s183, 3
        %p188 = scmp.lt.s32.totalorder %s19, 0
        %s189 = scalar_select %p188, %s19, 0
        %s190 = sadd.s32 %s189, %s187
        %s191 = smul.addr %s185, 12
        %s192 = sadd.s32 %s190, %s191
        %s193 = smul.addr %s192, 8
        %s194 = scalar_lea.vmem %s1, %s193
        %s195 = smul.u32 4, %s18
      $region24: #{_lambda_.2} parent=15 // pred_fallthru
        _
    $region16: #{_lambda_.2} parent=5 // pred_fallthru
      _
    %p196 = scmp.le.s32.totalorder 1, %s10
    %p197 = scmp.lt.s32.totalorder %s10, 3
    %p198 = pnand %p196, %p197
    %p199 = pneg %p198
    // Predicated region
    $region25: #{_lambda_.2} parent=5 // pred_check
      _
    $region26: #{_lambda_.2} parent=5 // pred_check_branch
      %201 = sbr.rel (%p198) target = $region28
    $region27: #{_lambda_.2} parent=5 // pred_region
      %s202 = ssub.s32 %s10, 1
      %s203 = smul.u32 4, %s21
      %p204 = scmp.lt.s32.totalorder %s20, 1
      %s205 = scalar_select %p204, %s20, 1
      %p206 = scmp.lt.s32.totalorder %s203, 3
      %s207 = scalar_select %p206, %s203, 3
      %p208 = scmp.lt.s32.totalorder %s22, 0
      %s209 = scalar_select %p208, %s22, 0
      %s210 = sadd.s32 %s209, %s207
      %s211 = smul.addr %s205, 12
      %s212 = sadd.s32 %s210, %s211
      %s213 = smul.addr %s212, 8
      %s214 = scalar_lea.vmem %s0, %s213
      %p215 = pneg %p59
      %p216 = pneg %p56
      %s217 = smul.u32 4, %s21
      %p218 = scmp.lt.s32.totalorder %s20, 1
      %s219 = scalar_select %p218, %s20, 1
      %p220 = scmp.lt.s32.totalorder %s217, 3
      %s221 = scalar_select %p220, %s217, 3
      %p222 = scmp.lt.s32.totalorder %s22, 0
      %s223 = scalar_select %p222, %s22, 0
      %s224 = sadd.s32 %s223, %s221
      %s225 = smul.addr %s219, 12
      %s226 = sadd.s32 %s224, %s225
      %s227 = smul.addr %s226, 8
      %s228 = scalar_lea.vmem %s1, %s227
      %p229 = pneg %p89
      %p230 = pneg %p86
      %p231 = pneg %p117
      %p232 = pneg %p114
      %p233 = scmp.lt.s32.totalorder %s20, 1
      %s234 = scalar_select %p233, %s20, 1
      %p235 = scmp.lt.s32.totalorder %s21, 0
      %s236 = scalar_select %p235, %s21, 0
      %s237 = sadd.s32 %s236, %s234
      %s238 = smul.addr %s237, 4
      %s239 = scalar_lea.vmem %s2, %s238
      %p240 = pneg %p145
      %p241 = pneg %p142
      %p242 = scmp.lt.s32.totalorder %s20, 1
      %s243 = scalar_select %p242, %s20, 1
      %p244 = scmp.lt.s32.totalorder %s21, 0
      %s245 = scalar_select %p244, %s21, 0
      %s246 = sadd.s32 %s245, %s243
      %s247 = smul.addr %s246, 4
      %s248 = scalar_lea.vmem %s3, %s247
      %s249 = smul.u32 4, %s21
      %p250 = scmp.lt.s32.totalorder %s20, 1
      %s251 = scalar_select %p250, %s20, 1
      %p252 = scmp.lt.s32.totalorder %s249, 3
      %s253 = scalar_select %p252, %s249, 3
      %p254 = scmp.lt.s32.totalorder %s22, 0
      %s255 = scalar_select %p254, %s22, 0
      %s256 = sadd.s32 %s255, %s253
      %s257 = smul.addr %s251, 12
      %s258 = sadd.s32 %s256, %s257
      %s259 = smul.addr %s258, 8
      %s260 = scalar_lea.vmem %s0, %s259
      %s261 = smul.u32 4, %s21
      %s262 = smul.u32 4, %s21
      %p263 = scmp.lt.s32.totalorder %s20, 1
      %s264 = scalar_select %p263, %s20, 1
      %p265 = scmp.lt.s32.totalorder %s262, 3
      %s266 = scalar_select %p265, %s262, 3
      %p267 = scmp.lt.s32.totalorder %s22, 0
      %s268 = scalar_select %p267, %s22, 0
      %s269 = sadd.s32 %s268, %s266
      %s270 = smul.addr %s264, 12
      %s271 = sadd.s32 %s269, %s270
      %s272 = smul.addr %s271, 8
      %s273 = scalar_lea.vmem %s1, %s272
      %s274 = smul.u32 4, %s21
      %p275 = scmp.lt.s32.totalorder %s20, 1
      %s276 = scalar_select %p275, %s20, 1
      %p277 = scmp.lt.s32.totalorder %s21, 0
      %s278 = scalar_select %p277, %s21, 0
      %s279 = sadd.s32 %s278, %s276
      %s280 = smul.addr %s279, 4
      %s281 = scalar_lea.vmem %s2, %s280
      %p282 = scmp.lt.s32.totalorder %s20, 1
      %s283 = scalar_select %p282, %s20, 1
      %p284 = scmp.lt.s32.totalorder %s21, 0
      %s285 = scalar_select %p284, %s21, 0
      %s286 = sadd.s32 %s285, %s283
      %s287 = smul.addr %s286, 4
      %s288 = scalar_lea.vmem %s3, %s287
      %p289 = scmp.eq.s32.totalorder %s22, 0
      // Predicated region
      $region29: #{_lambda_.2} parent=27 // pred_check
        %p290 = pneg %p289
      $region30: #{_lambda_.2} parent=27 // pred_check_branch
        %292 = sbr.rel (%p290) target = $region32
      $region31: #{_lambda_.2} parent=27 // pred_region
        %vm293 = vcmask 239616
        %294 = vst.msk [vmem:[%s281] sm:$0x7] %vm293, 0.0
        %295 = vst.msk [vmem:[%s288] sm:$0x7] %vm293, 0.0
      $region32: #{_lambda_.2} parent=27 // pred_fallthru
        _
      %v296 = vld [vmem:[%s281] sm:$0x7]
      %v297 = vld [vmem:[%s260] sm:$0xff]
      %v298 = vld [vmem:[%s260 + $0x8] sm:$0xff]
      %v299 = vld [vmem:[%s260 + $0x10] sm:$0xff]
      %v300 = vld [vmem:[%s260 + $0x18] sm:$0x3f]
      %v301 = vld [vmem:[%s260 + $0x20] sm:$0xff]
      %v302 = vld [vmem:[%s260 + $0x28] sm:$0xff]
      %v303 = vld [vmem:[%s260 + $0x30] sm:$0xff]
      %v304 = vld [vmem:[%s260 + $0x38] sm:$0x3f]
      %v305 = vld [vmem:[%s260 + $0x40] sm:$0xff]
      %v306 = vld [vmem:[%s260 + $0x48] sm:$0xff]
      %v307 = vld [vmem:[%s260 + $0x50] sm:$0xff]
      %v308 = vld [vmem:[%s260 + $0x58] sm:$0x3f]
      %vm309 = vcmask 244736
      %v310 = vsel %vm309, %v297, 0.0
      %311 = vadd.xlane.f32.xlu0 %v310
      %v312 = vpop.xlane.xlu0 %311
      %v313 = vsel %vm309, %v298, 0.0
      %314 = vadd.xlane.f32.xlu0 %v313
      %v315 = vpop.xlane.xlu0 %314
      %v316 = vsel %vm309, %v299, 0.0
      %317 = vadd.xlane.f32.xlu0 %v316
      %v318 = vpop.xlane.xlu0 %317
      %vm319 = vcmask 242688
      %v320 = vsel %vm319, %v300, 0.0
      %321 = vadd.xlane.f32.xlu0 %v320
      %v322 = vpop.xlane.xlu0 %321
      %v323 = vsel %vm309, %v301, 0.0
      %324 = vadd.xlane.f32.xlu0 %v323
      %v325 = vpop.xlane.xlu0 %324
      %v326 = vsel %vm309, %v302, 0.0
      %327 = vadd.xlane.f32.xlu0 %v326
      %v328 = vpop.xlane.xlu0 %327
      %v329 = vsel %vm309, %v303, 0.0
      %330 = vadd.xlane.f32.xlu0 %v329
      %v331 = vpop.xlane.xlu0 %330
      %v332 = vsel %vm319, %v304, 0.0
      %333 = vadd.xlane.f32.xlu0 %v332
      %v334 = vpop.xlane.xlu0 %333
      %v335 = vsel %vm309, %v305, 0.0
      %336 = vadd.xlane.f32.xlu0 %v335
      %v337 = vpop.xlane.xlu0 %336
      %v338 = vsel %vm309, %v306, 0.0
      %339 = vadd.xlane.f32.xlu0 %v338
      %v340 = vpop.xlane.xlu0 %339
      %v341 = vsel %vm309, %v307, 0.0
      %342 = vadd.xlane.f32.xlu0 %v341
      %v343 = vpop.xlane.xlu0 %342
      %v344 = vsel %vm319, %v308, 0.0
      %345 = vadd.xlane.f32.xlu0 %v344
      %v346 = vpop.xlane.xlu0 %345
      %v359 = vlaneseq
      %v360 = vand.u32 %v359, 127
      %v361 = vlaneseq
      %v362 = vshrl.u32 %v361, 7
      %v363 = vsub.s32 %v360, %v362
      %v364 = vrot.slane %v312, %v363
      %v365 = vadd.s32 %v360, 4294967288
      %v366 = vlaneseq
      %v367 = vshrl.u32 %v366, 7
      %v368 = vsub.s32 %v365, %v367
      %v369 = vrot.slane %v315, %v368
      %vm370 = vcmask 130112
      %v371 = vsel %vm370, %v369, %v364
      %v372 = vadd.s32 %v360, 4294967280
      %v373 = vlaneseq
      %v374 = vshrl.u32 %v373, 7
      %v375 = vsub.s32 %v372, %v374
      %v376 = vrot.slane %v318, %v375
      %vm377 = vcmask 195712
      %v378 = vsel %vm377, %v376, %v371
      %v379 = vadd.s32 %v360, 4294967272
      %v380 = vlaneseq
      %v381 = vshrl.u32 %v380, 7
      %v382 = vsub.s32 %v379, %v381
      %v383 = vrot.slane %v322, %v382
      %vm384 = vcmask 261312
      %v385 = vsel %vm384, %v383, %v378
      %v386 = vlaneseq
      %v387 = vshrl.u32 %v386, 7
      %v388 = vsub.s32 %v360, %v387
      %v389 = vrot.slane %v325, %v388
      %v390 = vlaneseq
      %v391 = vshrl.u32 %v390, 7
      %v392 = vsub.s32 %v365, %v391
      %v393 = vrot.slane %v328, %v392
      %v394 = vsel %vm370, %v393, %v389
      %v395 = vlaneseq
      %v396 = vshrl.u32 %v395, 7
      %v397 = vsub.s32 %v372, %v396
      %v398 = vrot.slane %v331, %v397
      %v399 = vsel %vm377, %v398, %v394
      %v400 = vlaneseq
      %v401 = vshrl.u32 %v400, 7
      %v402 = vsub.s32 %v379, %v401
      %v403 = vrot.slane %v334, %v402
      %v404 = vsel %vm384, %v403, %v399
      %v405 = vlaneseq
      %v406 = vshrl.u32 %v405, 7
      %v407 = vsub.s32 %v360, %v406
      %v408 = vrot.slane %v337, %v407
      %v409 = vlaneseq
      %v410 = vshrl.u32 %v409, 7
      %v411 = vsub.s32 %v365, %v410
      %v412 = vrot.slane %v340, %v411
      %v413 = vsel %vm370, %v412, %v408
      %v414 = vlaneseq
      %v415 = vshrl.u32 %v414, 7
      %v416 = vsub.s32 %v372, %v415
      %v417 = vrot.slane %v343, %v416
      %v418 = vsel %vm377, %v417, %v413
      %v419 = vlaneseq
      %v420 = vshrl.u32 %v419, 7
      %v421 = vsub.s32 %v379, %v420
      %v422 = vrot.slane %v346, %v421
      %v423 = vsel %vm384, %v422, %v418
      %vm424 = vcmask 1041409
      %v425 = vsel %vm424, %v404, %v385
      %vm426 = vcmask 1042434
      %v427 = vsel %vm426, %v423, %v425
      %v429 = vadd.f32 %v296, %v427
      %vm430 = vcmask 239616
      %431 = vst.msk [vmem:[%s281] sm:$0x7] %vm430, %v429
      %v432 = vld [vmem:[%s288] sm:$0x7]
      %v433 = vld [vmem:[%s273] sm:$0xff]
      %v434 = vld [vmem:[%s273 + $0x8] sm:$0xff]
      %v435 = vld [vmem:[%s273 + $0x10] sm:$0xff]
      %v436 = vld [vmem:[%s273 + $0x18] sm:$0x3f]
      %v437 = vld [vmem:[%s273 + $0x20] sm:$0xff]
      %v438 = vld [vmem:[%s273 + $0x28] sm:$0xff]
      %v439 = vld [vmem:[%s273 + $0x30] sm:$0xff]
      %v440 = vld [vmem:[%s273 + $0x38] sm:$0x3f]
      %v441 = vld [vmem:[%s273 + $0x40] sm:$0xff]
      %v442 = vld [vmem:[%s273 + $0x48] sm:$0xff]
      %v443 = vld [vmem:[%s273 + $0x50] sm:$0xff]
      %v444 = vld [vmem:[%s273 + $0x58] sm:$0x3f]
      %v445 = vsel %vm309, %v433, 0.0
      %446 = vadd.xlane.f32.xlu0 %v445
      %v447 = vpop.xlane.xlu0 %446
      %v448 = vsel %vm309, %v434, 0.0
      %449 = vadd.xlane.f32.xlu0 %v448
      %v450 = vpop.xlane.xlu0 %449
      %v451 = vsel %vm309, %v435, 0.0
      %452 = vadd.xlane.f32.xlu0 %v451
      %v453 = vpop.xlane.xlu0 %452
      %v454 = vsel %vm319, %v436, 0.0
      %455 = vadd.xlane.f32.xlu0 %v454
      %v456 = vpop.xlane.xlu0 %455
      %v457 = vsel %vm309, %v437, 0.0
      %458 = vadd.xlane.f32.xlu0 %v457
      %v459 = vpop.xlane.xlu0 %458
      %v460 = vsel %vm309, %v438, 0.0
      %461 = vadd.xlane.f32.xlu0 %v460
      %v462 = vpop.xlane.xlu0 %461
      %v463 = vsel %vm309, %v439, 0.0
      %464 = vadd.xlane.f32.xlu0 %v463
      %v465 = vpop.xlane.xlu0 %464
      %v466 = vsel %vm319, %v440, 0.0
      %467 = vadd.xlane.f32.xlu0 %v466
      %v468 = vpop.xlane.xlu0 %467
      %v469 = vsel %vm309, %v441, 0.0
      %470 = vadd.xlane.f32.xlu0 %v469
      %v471 = vpop.xlane.xlu0 %470
      %v472 = vsel %vm309, %v442, 0.0
      %473 = vadd.xlane.f32.xlu0 %v472
      %v474 = vpop.xlane.xlu0 %473
      %v475 = vsel %vm309, %v443, 0.0
      %476 = vadd.xlane.f32.xlu0 %v475
      %v477 = vpop.xlane.xlu0 %476
      %v478 = vsel %vm319, %v444, 0.0
      %479 = vadd.xlane.f32.xlu0 %v478
      %v480 = vpop.xlane.xlu0 %479
      %v493 = vlaneseq
      %v494 = vshrl.u32 %v493, 7
      %v495 = vsub.s32 %v360, %v494
      %v496 = vrot.slane %v447, %v495
      %v497 = vlaneseq
      %v498 = vshrl.u32 %v497, 7
      %v499 = vsub.s32 %v365, %v498
      %v500 = vrot.slane %v450, %v499
      %v501 = vsel %vm370, %v500, %v496
      %v502 = vlaneseq
      %v503 = vshrl.u32 %v502, 7
      %v504 = vsub.s32 %v372, %v503
      %v505 = vrot.slane %v453, %v504
      %v506 = vsel %vm377, %v505, %v501
      %v507 = vlaneseq
      %v508 = vshrl.u32 %v507, 7
      %v509 = vsub.s32 %v379, %v508
      %v510 = vrot.slane %v456, %v509
      %v511 = vsel %vm384, %v510, %v506
      %v512 = vlaneseq
      %v513 = vshrl.u32 %v512, 7
      %v514 = vsub.s32 %v360, %v513
      %v515 = vrot.slane %v459, %v514
      %v516 = vlaneseq
      %v517 = vshrl.u32 %v516, 7
      %v518 = vsub.s32 %v365, %v517
      %v519 = vrot.slane %v462, %v518
      %v520 = vsel %vm370, %v519, %v515
      %v521 = vlaneseq
      %v522 = vshrl.u32 %v521, 7
      %v523 = vsub.s32 %v372, %v522
      %v524 = vrot.slane %v465, %v523
      %v525 = vsel %vm377, %v524, %v520
      %v526 = vlaneseq
      %v527 = vshrl.u32 %v526, 7
      %v528 = vsub.s32 %v379, %v527
      %v529 = vrot.slane %v468, %v528
      %v530 = vsel %vm384, %v529, %v525
      %v531 = vlaneseq
      %v532 = vshrl.u32 %v531, 7
      %v533 = vsub.s32 %v360, %v532
      %v534 = vrot.slane %v471, %v533
      %v535 = vlaneseq
      %v536 = vshrl.u32 %v535, 7
      %v537 = vsub.s32 %v365, %v536
      %v538 = vrot.slane %v474, %v537
      %v539 = vsel %vm370, %v538, %v534
      %v540 = vlaneseq
      %v541 = vshrl.u32 %v540, 7
      %v542 = vsub.s32 %v372, %v541
      %v543 = vrot.slane %v477, %v542
      %v544 = vsel %vm377, %v543, %v539
      %v545 = vlaneseq
      %v546 = vshrl.u32 %v545, 7
      %v547 = vsub.s32 %v379, %v546
      %v548 = vrot.slane %v480, %v547
      %v549 = vsel %vm384, %v548, %v544
      %v550 = vsel %vm424, %v530, %v511
      %v551 = vsel %vm426, %v549, %v550
      %v553 = vadd.f32 %v432, %v551
      %554 = vst.msk [vmem:[%s288] sm:$0x7] %vm430, %v553
      %p555 = scmp.lt.s32.totalorder %s20, 1
      %s556 = scalar_select %p555, %s20, 1
      %p557 = scmp.lt.s32.totalorder %s21, 0
      %s558 = scalar_select %p557, %s21, 0
      %s559 = sadd.s32 %s558, %s556
      %s560 = smul.addr %s559, 4
      %s561 = scalar_lea.vmem %s2, %s560
      %p562 = scmp.lt.s32.totalorder %s20, 1
      %s563 = scalar_select %p562, %s20, 1
      %p564 = scmp.lt.s32.totalorder %s21, 0
      %s565 = scalar_select %p564, %s21, 0
      %s566 = sadd.s32 %s565, %s563
      %s567 = smul.addr %s566, 4
      %s568 = scalar_lea.vmem %s3, %s567
      // Predicated region
      $region33: #{_lambda_.2} parent=27 // pred_check
        %p569 = pneg %p114
      $region34: #{_lambda_.2} parent=27 // pred_check_branch
        %571 = sbr.rel (%p569) target = $region36
      $region35: #{_lambda_.2} parent=27 // pred_region
        _
      $region36: #{_lambda_.2} parent=27 // pred_fallthru
        _
      // Predicated region
      $region37: #{_lambda_.2} parent=27 // pred_check
        %p572 = pneg %p142
      $region38: #{_lambda_.2} parent=27 // pred_check_branch
        %574 = sbr.rel (%p572) target = $region40
      $region39: #{_lambda_.2} parent=27 // pred_region
        _
      $region40: #{_lambda_.2} parent=27 // pred_fallthru
        _
    $region28: #{_lambda_.2} parent=5 // pred_fallthru
      _
    %p575 = scmp.le.s32.totalorder 2, %s10
    // Predicated region
    $region41: #{_lambda_.2} parent=5 // pred_check
      %p576 = pneg %p575
    $region42: #{_lambda_.2} parent=5 // pred_check_branch
      %578 = sbr.rel (%p576) target = $region44
    $region43: #{_lambda_.2} parent=5 // pred_region
      %s579 = ssub.s32 %s10, 2
      // Predicated region
      $region45: #{_lambda_.2} parent=43 // pred_check
        %p580 = pneg %p120
      $region46: #{_lambda_.2} parent=43 // pred_check_branch
        %582 = sbr.rel (%p580) target = $region48
      $region47: #{_lambda_.2} parent=43 // pred_region
        %p583 = scmp.lt.s32.totalorder %s23, 1
        %s584 = scalar_select %p583, %s23, 1
        %p585 = scmp.lt.s32.totalorder %s24, 0
        %s586 = scalar_select %p585, %s24, 0
        %s587 = sadd.s32 %s586, %s584
        %s588 = smul.addr %s587, 4
        %s589 = scalar_lea.vmem %s2, %s588
      $region48: #{_lambda_.2} parent=43 // pred_fallthru
        _
      // Predicated region
      $region49: #{_lambda_.2} parent=43 // pred_check
        %p590 = pneg %p148
      $region50: #{_lambda_.2} parent=43 // pred_check_branch
        %592 = sbr.rel (%p590) target = $region52
      $region51: #{_lambda_.2} parent=43 // pred_region
        %p593 = scmp.lt.s32.totalorder %s23, 1
        %s594 = scalar_select %p593, %s23, 1
        %p595 = scmp.lt.s32.totalorder %s24, 0
        %s596 = scalar_select %p595, %s24, 0
        %s597 = sadd.s32 %s596, %s594
        %s598 = smul.addr %s597, 4
        %s599 = scalar_lea.vmem %s3, %s598
      $region52: #{_lambda_.2} parent=43 // pred_fallthru
        _
    $region44: #{_lambda_.2} parent=5 // pred_fallthru
      _
  $region6: #{_lambda_.2} parent=0 // loop_footer
    %s14 = sadd.s32 1, %s10
  $region7: #{_lambda_.2} parent=0 // loop_footer_branch
    %9 = sbr.rel target = $region3
  $region8: #{_lambda_.2} parent=0 // loop_exit
    _

// kernel: _lambda_.3
$region0: #{_lambda_.3}
  #allocation0 [shape = 'u32[]', space=smem, size = 0x4, offset = 0x4, fixed_abs, tag = 'smem constant byte address 0x4 - core index']
  #allocation1 [shape = 'u32[144,128]{1,0:T(1,128)}', space=vmem, size = 0x12000, scoped, tag = 'internal scratch']
  %s0 = inlined_call_operand.vmem [shape: f32[1,3,60], index: 0, kind: input, shape index: {}]
  %s1 = inlined_call_operand.vmem [shape: f32[1,3,60], index: 1, kind: input, shape index: {}]
  %s2 = inlined_call_operand.vmem [shape: f32[1,4,60], index: 2, kind: input, shape index: {}]
  %s3 = inlined_call_operand.vmem [shape: f32[1,4,60], index: 3, kind: input, shape index: {}]
  %s4 = inlined_call_operand.vmem [shape: f32[6,4], index: 4, kind: input, shape index: {}]
  %s5 = inlined_call_operand.vmem [shape: f32[6,4], index: 5, kind: input, shape index: {}]
  %s6 = inlined_call_operand.vmem [shape: f32[6,2], index: 6, kind: input, shape index: {}]
  %s7 = inlined_call_operand.vmem [shape: f32[6,2], index: 7, kind: input, shape index: {}]
  %s8 = inlined_call_operand.vmem [shape: f32[2,2], index: 8, kind: input, shape index: {}]
  %s9 = inlined_call_operand.vmem [shape: f32[2,2], index: 9, kind: input, shape index: {}]
  %s10 = inlined_call_operand.vmem [shape: f32[2,1], index: 10, kind: input, shape index: {}]
  %s11 = inlined_call_operand.vmem [shape: f32[60,2], index: 11, kind: input, shape index: {}]
  %s12 = inlined_call_operand.vmem [shape: f32[1,2,2], index: 12, kind: output, shape index: {}]
  %s13 = sld [smem:[#allocation0]]
  $region58: #{_lambda_.3} parent=0
    _
  %s15 = ssub.s32 1, %s13
  %s16 = scalar_select 0, %s15, %s13
  // Predicated region
  $region2: #{_lambda_.3} parent=0 // pred_check
    _
  $region3: #{_lambda_.3} parent=0 // pred_check_branch
    %18 = sbr.rel (0) target = $region5
  $region4: #{_lambda_.3} parent=0 // pred_region
    _
  $region5: #{_lambda_.3} parent=0 // pred_fallthru
    _
  // Predicated region
  $region6: #{_lambda_.3} parent=0 // pred_check
    _
  $region7: #{_lambda_.3} parent=0 // pred_check_branch
    %20 = sbr.rel (0) target = $region9
  $region8: #{_lambda_.3} parent=0 // pred_region
    _
  $region9: #{_lambda_.3} parent=0 // pred_fallthru
    _
  // Predicated region
  $region10: #{_lambda_.3} parent=0 // pred_check
    _
  $region11: #{_lambda_.3} parent=0 // pred_check_branch
    %22 = sbr.rel (0) target = $region13
  $region12: #{_lambda_.3} parent=0 // pred_region
    _
  $region13: #{_lambda_.3} parent=0 // pred_fallthru
    _
  // Predicated region
  $region14: #{_lambda_.3} parent=0 // pred_check
    _
  $region15: #{_lambda_.3} parent=0 // pred_check_branch
    %24 = sbr.rel (0) target = $region17
  $region16: #{_lambda_.3} parent=0 // pred_region
    _
  $region17: #{_lambda_.3} parent=0 // pred_fallthru
    _
  // Predicated region
  $region18: #{_lambda_.3} parent=0 // pred_check
    _
  $region19: #{_lambda_.3} parent=0 // pred_check_branch
    %26 = sbr.rel (0) target = $region21
  $region20: #{_lambda_.3} parent=0 // pred_region
    _
  $region21: #{_lambda_.3} parent=0 // pred_fallthru
    _
  // Predicated region
  $region22: #{_lambda_.3} parent=0 // pred_check
    _
  $region23: #{_lambda_.3} parent=0 // pred_check_branch
    %28 = sbr.rel (0) target = $region25
  $region24: #{_lambda_.3} parent=0 // pred_region
    _
  $region25: #{_lambda_.3} parent=0 // pred_fallthru
    _
  // Predicated region
  $region26: #{_lambda_.3} parent=0 // pred_check
    _
  $region27: #{_lambda_.3} parent=0 // pred_check_branch
    %30 = sbr.rel (0) target = $region29
  $region28: #{_lambda_.3} parent=0 // pred_region
    _
  $region29: #{_lambda_.3} parent=0 // pred_fallthru
    _
  // Predicated region
  $region30: #{_lambda_.3} parent=0 // pred_check
    _
  $region31: #{_lambda_.3} parent=0 // pred_check_branch
    %32 = sbr.rel (0) target = $region33
  $region32: #{_lambda_.3} parent=0 // pred_region
    _
  $region33: #{_lambda_.3} parent=0 // pred_fallthru
    _
  // Predicated region
  $region34: #{_lambda_.3} parent=0 // pred_check
    _
  $region35: #{_lambda_.3} parent=0 // pred_check_branch
    %34 = sbr.rel (0) target = $region37
  $region36: #{_lambda_.3} parent=0 // pred_region
    _
  $region37: #{_lambda_.3} parent=0 // pred_fallthru
    _
  // Predicated region
  $region38: #{_lambda_.3} parent=0 // pred_check
    _
  $region39: #{_lambda_.3} parent=0 // pred_check_branch
    %36 = sbr.rel (0) target = $region41
  $region40: #{_lambda_.3} parent=0 // pred_region
    _
  $region41: #{_lambda_.3} parent=0 // pred_fallthru
    _
  // Predicated region
  $region42: #{_lambda_.3} parent=0 // pred_check
    _
  $region43: #{_lambda_.3} parent=0 // pred_check_branch
    %38 = sbr.rel (0) target = $region45
  $region44: #{_lambda_.3} parent=0 // pred_region
    _
  $region45: #{_lambda_.3} parent=0 // pred_fallthru
    _
  // Predicated region
  $region46: #{_lambda_.3} parent=0 // pred_check
    _
  $region47: #{_lambda_.3} parent=0 // pred_check_branch
    %40 = sbr.rel (0) target = $region49
  $region48: #{_lambda_.3} parent=0 // pred_region
    _
  $region49: #{_lambda_.3} parent=0 // pred_fallthru
    _
  %v41 = vld [vmem:[%s0] sm:$0x7]
  %v42 = vld [vmem:[%s1] sm:$0x7]
  %v43 = vld [vmem:[%s2] sm:$0xf]
  %v44 = vld [vmem:[%s3] sm:$0xf]
  %v45 = vld [vmem:[%s4] sm:$0x3f]
  %v46 = vld [vmem:[%s5] sm:$0x3f]
  %vm47 = vcmask 31744
  %v49 = vsel %vm47, %v45, 0
  %vm51 = vcmask 1043456
  %v53 = vsel %vm51, %v43, 0
  %55 = vmatprep.subr.mxu0 0.0
  %56 = vmatpush1.msra.mxu0 %v53
  %57 = vmatprep.subr.mxu0 0.0
  %58 = vmatpush1.msra.mxu0 0.0
  %59 = vmatprep.subr.mxu0 0.0
  %60 = vmatpush1.msra.mxu0 0.0
  %61 = vmatprep.subr.mxu0 0.0
  %62 = vmatpush1.msra.mxu0 0.0
  %63 = vmatprep.subr.mxu0 0.0
  %64 = vmatpush1.msra.mxu0 0.0
  %65 = vmatprep.subr.mxu0 0.0
  %66 = vmatpush1.msra.mxu0 0.0
  %67 = vmatprep.subr.mxu0 0.0
  %68 = vmatpush1.msra.mxu0 0.0
  %69 = vmatprep.subr.mxu0 0.0
  %70 = vmatpush1.msra.mxu0 0.0
  %71 = vmatprep.subr.mxu0 0.0
  %72 = vmatpush1.msra.mxu0 0.0
  %73 = vmatprep.subr.mxu0 0.0
  %74 = vmatpush1.msra.mxu0 0.0
  %75 = vmatprep.subr.mxu0 0.0
  %76 = vmatpush1.msra.mxu0 0.0
  %77 = vmatprep.subr.mxu0 0.0
  %78 = vmatpush1.msra.mxu0 0.0
  %79 = vmatprep.subr.mxu0 0.0
  %80 = vmatpush1.msra.mxu0 0.0
  %81 = vmatprep.subr.mxu0 0.0
  %82 = vmatpush1.msra.mxu0 0.0
  %83 = vmatprep.subr.mxu0 0.0
  %84 = vmatpush1.msra.mxu0 0.0
  %85 = vmatprep.subr.mxu0 0.0
  %86 = vmatpush1.msra.mxu0 0.0
  %87 = vmatprep.subr.mxu0 0.0
  %88 = vmatpush1.msra.mxu0 0.0
  %89 = vmatprep.subr.mxu0 0.0
  %90 = vmatpush1.msra.mxu0 0.0
  %91 = vmatprep.subr.mxu0 0.0
  %92 = vmatpush1.msra.mxu0 0.0
  %93 = vmatprep.subr.mxu0 0.0
  %94 = vmatpush1.msra.mxu0 0.0
  %95 = vmatprep.subr.mxu0 0.0
  %96 = vmatpush1.msra.mxu0 0.0
  %97 = vmatprep.subr.mxu0 0.0
  %98 = vmatpush1.msra.mxu0 0.0
  %99 = vmatprep.subr.mxu0 0.0
  %100 = vmatpush1.msra.mxu0 0.0
  %101 = vmatprep.subr.mxu0 0.0
  %102 = vmatpush1.msra.mxu0 0.0
  %103 = vmatprep.subr.mxu0 0.0
  %104 = vmatpush1.msra.mxu0 0.0
  %105 = vmatprep.subr.mxu0 0.0
  %106 = vmatpush1.msra.mxu0 0.0
  %107 = vmatprep.subr.mxu0 0.0
  %108 = vmatpush1.msra.mxu0 0.0
  %109 = vmatprep.subr.mxu0 0.0
  %110 = vmatpush1.msra.mxu0 0.0
  %111 = vmatprep.subr.mxu0 0.0
  %112 = vmatpush1.msra.mxu0 0.0
  %113 = vmatprep.subr.mxu0 0.0
  %114 = vmatpush1.msra.mxu0 0.0
  %115 = vmatprep.subr.mxu0 0.0
  %116 = vmatpush1.msra.mxu0 0.0
  %117 = vmatprep.subr.mxu0 0.0
  %118 = vmatpush1.msra.mxu0 0.0
  %119 = vmatprep.mubr.f32.mxu0 0.0
  %120 = vmatmul.mubr.f32.gmra.mrb[0].mxu0 %v49
  %v121 = vpop.f32.mrb[0].mxu0
  %v122 = vadd.f32 0.0, %v121
  %v123 = vpop.f32.mrb[0].mxu0
  %124 = vdwg.mxu0
  %v126 = vsel %vm47, %v46, 0
  %v129 = vsel %vm51, %v44, 0
  %131 = vmatprep.subr.mxu0 0.0
  %132 = vmatpush1.msra.mxu0 %v129
  %133 = vmatprep.subr.mxu0 0.0
  %134 = vmatpush1.msra.mxu0 0.0
  %135 = vmatprep.subr.mxu0 0.0
  %136 = vmatpush1.msra.mxu0 0.0
  %137 = vmatprep.subr.mxu0 0.0
  %138 = vmatpush1.msra.mxu0 0.0
  %139 = vmatprep.subr.mxu0 0.0
  %140 = vmatpush1.msra.mxu0 0.0
  %141 = vmatprep.subr.mxu0 0.0
  %142 = vmatpush1.msra.mxu0 0.0
  %143 = vmatprep.subr.mxu0 0.0
  %144 = vmatpush1.msra.mxu0 0.0
  %145 = vmatprep.subr.mxu0 0.0
  %146 = vmatpush1.msra.mxu0 0.0
  %147 = vmatprep.subr.mxu0 0.0
  %148 = vmatpush1.msra.mxu0 0.0
  %149 = vmatprep.subr.mxu0 0.0
  %150 = vmatpush1.msra.mxu0 0.0
  %151 = vmatprep.subr.mxu0 0.0
  %152 = vmatpush1.msra.mxu0 0.0
  %153 = vmatprep.subr.mxu0 0.0
  %154 = vmatpush1.msra.mxu0 0.0
  %155 = vmatprep.subr.mxu0 0.0
  %156 = vmatpush1.msra.mxu0 0.0
  %157 = vmatprep.subr.mxu0 0.0
  %158 = vmatpush1.msra.mxu0 0.0
  %159 = vmatprep.subr.mxu0 0.0
  %160 = vmatpush1.msra.mxu0 0.0
  %161 = vmatprep.subr.mxu0 0.0
  %162 = vmatpush1.msra.mxu0 0.0
  %163 = vmatprep.subr.mxu0 0.0
  %164 = vmatpush1.msra.mxu0 0.0
  %165 = vmatprep.subr.mxu0 0.0
  %166 = vmatpush1.msra.mxu0 0.0
  %167 = vmatprep.subr.mxu0 0.0
  %168 = vmatpush1.msra.mxu0 0.0
  %169 = vmatprep.subr.mxu0 0.0
  %170 = vmatpush1.msra.mxu0 0.0
  %171 = vmatprep.subr.mxu0 0.0
  %172 = vmatpush1.msra.mxu0 0.0
  %173 = vmatprep.subr.mxu0 0.0
  %174 = vmatpush1.msra.mxu0 0.0
  %175 = vmatprep.subr.mxu0 0.0
  %176 = vmatpush1.msra.mxu0 0.0
  %177 = vmatprep.subr.mxu0 0.0
  %178 = vmatpush1.msra.mxu0 0.0
  %179 = vmatprep.subr.mxu0 0.0
  %180 = vmatpush1.msra.mxu0 0.0
  %181 = vmatprep.subr.mxu0 0.0
  %182 = vmatpush1.msra.mxu0 0.0
  %183 = vmatprep.subr.mxu0 0.0
  %184 = vmatpush1.msra.mxu0 0.0
  %185 = vmatprep.subr.mxu0 0.0
  %186 = vmatpush1.msra.mxu0 0.0
  %187 = vmatprep.subr.mxu0 0.0
  %188 = vmatpush1.msra.mxu0 0.0
  %189 = vmatprep.subr.mxu0 0.0
  %190 = vmatpush1.msra.mxu0 0.0
  %191 = vmatprep.subr.mxu0 0.0
  %192 = vmatpush1.msra.mxu0 0.0
  %193 = vmatprep.subr.mxu0 0.0
  %194 = vmatpush1.msra.mxu0 0.0
  %195 = vmatprep.mubr.f32.mxu0 0.0
  %196 = vmatmul.mubr.f32.gmra.mrb[0].mxu0 %v126
  %v197 = vpop.f32.mrb[0].mxu0
  %v198 = vadd.f32 0.0, %v197
  %v199 = vpop.f32.mrb[0].mxu0
  %200 = vdwg.mxu0
  %v201 = vlaneseq
  %v202 = vshrl.u32 %v201, 7
  %v203 = vsub.s32 0, %v202
  %v204 = vrot.slane %v41, %v203
  %v205 = vmul.f32 %v204, %v122
  %v206 = vlaneseq
  %v207 = vshrl.u32 %v206, 7
  %v208 = vsub.s32 0, %v207
  %v209 = vrot.slane %v42, %v208
  %v210 = vmul.f32 %v209, %v198
  %v211 = vsub.f32 %v205, %v210
  %v212 = vmul.f32 %v209, %v122
  %v213 = vmul.f32 %v204, %v198
  %v214 = vadd.f32 %v212, %v213
  %v215 = vlaneseq
  %v216 = vshrl.u32 %v215, 7
  %v217 = vsub.s32 1, %v216
  %v218 = vrot.slane %v41, %v217
  %v219 = vmul.f32 %v218, %v122
  %v220 = vlaneseq
  %v221 = vshrl.u32 %v220, 7
  %v222 = vsub.s32 1, %v221
  %v223 = vrot.slane %v42, %v222
  %v224 = vmul.f32 %v223, %v198
  %v225 = vsub.f32 %v219, %v224
  %v226 = vmul.f32 %v223, %v122
  %v227 = vmul.f32 %v218, %v198
  %v228 = vadd.f32 %v226, %v227
  %v230 = vrot.slane %v225, 2
  %v232 = vadd.f32 %v211, %v230
  %v234 = vrot.slane %v228, 2
  %v236 = vadd.f32 %v214, %v234
  %v237 = vlaneseq
  %v238 = vshrl.u32 %v237, 7
  %v239 = vsub.s32 2, %v238
  %v240 = vrot.slane %v41, %v239
  %v241 = vmul.f32 %v240, %v122
  %v242 = vlaneseq
  %v243 = vshrl.u32 %v242, 7
  %v244 = vsub.s32 2, %v243
  %v245 = vrot.slane %v42, %v244
  %v246 = vmul.f32 %v245, %v198
  %v247 = vsub.f32 %v241, %v246
  %v248 = vmul.f32 %v245, %v122
  %v249 = vmul.f32 %v240, %v198
  %v250 = vadd.f32 %v248, %v249
  %v252 = vrot.slane %v247, 4
  %v254 = vadd.f32 %v232, %v252
  %v256 = vrot.slane %v250, 4
  %v258 = vadd.f32 %v236, %v256
  %v259 = vld [vmem:[%s6] sm:$0x3f]
  %v260 = vld [vmem:[%s7] sm:$0x3f]
  %vm261 = vcmask 15360
  %v263 = vsel %vm261, %v259, 0
  %vm265 = vcmask 1041408
  %v267 = vsel %vm265, %v254, 0
  %269 = vmatprep.subr.mxu0 0.0
  %270 = vmatpush1.msra.mxu0 %v267
  %271 = vmatprep.subr.mxu0 0.0
  %272 = vmatpush1.msra.mxu0 0.0
  %273 = vmatprep.subr.mxu0 0.0
  %274 = vmatpush1.msra.mxu0 0.0
  %275 = vmatprep.subr.mxu0 0.0
  %276 = vmatpush1.msra.mxu0 0.0
  %277 = vmatprep.subr.mxu0 0.0
  %278 = vmatpush1.msra.mxu0 0.0
  %279 = vmatprep.subr.mxu0 0.0
  %280 = vmatpush1.msra.mxu0 0.0
  %281 = vmatprep.subr.mxu0 0.0
  %282 = vmatpush1.msra.mxu0 0.0
  %283 = vmatprep.subr.mxu0 0.0
  %284 = vmatpush1.msra.mxu0 0.0
  %285 = vmatprep.subr.mxu0 0.0
  %286 = vmatpush1.msra.mxu0 0.0
  %287 = vmatprep.subr.mxu0 0.0
  %288 = vmatpush1.msra.mxu0 0.0
  %289 = vmatprep.subr.mxu0 0.0
  %290 = vmatpush1.msra.mxu0 0.0
  %291 = vmatprep.subr.mxu0 0.0
  %292 = vmatpush1.msra.mxu0 0.0
  %293 = vmatprep.subr.mxu0 0.0
  %294 = vmatpush1.msra.mxu0 0.0
  %295 = vmatprep.subr.mxu0 0.0
  %296 = vmatpush1.msra.mxu0 0.0
  %297 = vmatprep.subr.mxu0 0.0
  %298 = vmatpush1.msra.mxu0 0.0
  %299 = vmatprep.subr.mxu0 0.0
  %300 = vmatpush1.msra.mxu0 0.0
  %301 = vmatprep.subr.mxu0 0.0
  %302 = vmatpush1.msra.mxu0 0.0
  %303 = vmatprep.subr.mxu0 0.0
  %304 = vmatpush1.msra.mxu0 0.0
  %305 = vmatprep.subr.mxu0 0.0
  %306 = vmatpush1.msra.mxu0 0.0
  %307 = vmatprep.subr.mxu0 0.0
  %308 = vmatpush1.msra.mxu0 0.0
  %309 = vmatprep.subr.mxu0 0.0
  %310 = vmatpush1.msra.mxu0 0.0
  %311 = vmatprep.subr.mxu0 0.0
  %312 = vmatpush1.msra.mxu0 0.0
  %313 = vmatprep.subr.mxu0 0.0
  %314 = vmatpush1.msra.mxu0 0.0
  %315 = vmatprep.subr.mxu0 0.0
  %316 = vmatpush1.msra.mxu0 0.0
  %317 = vmatprep.subr.mxu0 0.0
  %318 = vmatpush1.msra.mxu0 0.0
  %319 = vmatprep.subr.mxu0 0.0
  %320 = vmatpush1.msra.mxu0 0.0
  %321 = vmatprep.subr.mxu0 0.0
  %322 = vmatpush1.msra.mxu0 0.0
  %323 = vmatprep.subr.mxu0 0.0
  %324 = vmatpush1.msra.mxu0 0.0
  %325 = vmatprep.subr.mxu0 0.0
  %326 = vmatpush1.msra.mxu0 0.0
  %327 = vmatprep.subr.mxu0 0.0
  %328 = vmatpush1.msra.mxu0 0.0
  %329 = vmatprep.subr.mxu0 0.0
  %330 = vmatpush1.msra.mxu0 0.0
  %331 = vmatprep.subr.mxu0 0.0
  %332 = vmatpush1.msra.mxu0 0.0
  %333 = vmatprep.mubr.f32.mxu0 0.0
  %334 = vmatmul.mubr.f32.gmra.mrb[0].mxu0 %v263
  %v335 = vpop.f32.mrb[0].mxu0
  %v336 = vadd.f32 0.0, %v335
  %v337 = vpop.f32.mrb[0].mxu0
  %338 = vdwg.mxu0
  %v340 = vsel %vm261, %v260, 0
  %v343 = vsel %vm265, %v258, 0
  %345 = vmatprep.subr.mxu0 0.0
  %346 = vmatpush1.msra.mxu0 %v343
  %347 = vmatprep.subr.mxu0 0.0
  %348 = vmatpush1.msra.mxu0 0.0
  %349 = vmatprep.subr.mxu0 0.0
  %350 = vmatpush1.msra.mxu0 0.0
  %351 = vmatprep.subr.mxu0 0.0
  %352 = vmatpush1.msra.mxu0 0.0
  %353 = vmatprep.subr.mxu0 0.0
  %354 = vmatpush1.msra.mxu0 0.0
  %355 = vmatprep.subr.mxu0 0.0
  %356 = vmatpush1.msra.mxu0 0.0
  %357 = vmatprep.subr.mxu0 0.0
  %358 = vmatpush1.msra.mxu0 0.0
  %359 = vmatprep.subr.mxu0 0.0
  %360 = vmatpush1.msra.mxu0 0.0
  %361 = vmatprep.subr.mxu0 0.0
  %362 = vmatpush1.msra.mxu0 0.0
  %363 = vmatprep.subr.mxu0 0.0
  %364 = vmatpush1.msra.mxu0 0.0
  %365 = vmatprep.subr.mxu0 0.0
  %366 = vmatpush1.msra.mxu0 0.0
  %367 = vmatprep.subr.mxu0 0.0
  %368 = vmatpush1.msra.mxu0 0.0
  %369 = vmatprep.subr.mxu0 0.0
  %370 = vmatpush1.msra.mxu0 0.0
  %371 = vmatprep.subr.mxu0 0.0
  %372 = vmatpush1.msra.mxu0 0.0
  %373 = vmatprep.subr.mxu0 0.0
  %374 = vmatpush1.msra.mxu0 0.0
  %375 = vmatprep.subr.mxu0 0.0
  %376 = vmatpush1.msra.mxu0 0.0
  %377 = vmatprep.subr.mxu0 0.0
  %378 = vmatpush1.msra.mxu0 0.0
  %379 = vmatprep.subr.mxu0 0.0
  %380 = vmatpush1.msra.mxu0 0.0
  %381 = vmatprep.subr.mxu0 0.0
  %382 = vmatpush1.msra.mxu0 0.0
  %383 = vmatprep.subr.mxu0 0.0
  %384 = vmatpush1.msra.mxu0 0.0
  %385 = vmatprep.subr.mxu0 0.0
  %386 = vmatpush1.msra.mxu0 0.0
  %387 = vmatprep.subr.mxu0 0.0
  %388 = vmatpush1.msra.mxu0 0.0
  %389 = vmatprep.subr.mxu0 0.0
  %390 = vmatpush1.msra.mxu0 0.0
  %391 = vmatprep.subr.mxu0 0.0
  %392 = vmatpush1.msra.mxu0 0.0
  %393 = vmatprep.subr.mxu0 0.0
  %394 = vmatpush1.msra.mxu0 0.0
  %395 = vmatprep.subr.mxu0 0.0
  %396 = vmatpush1.msra.mxu0 0.0
  %397 = vmatprep.subr.mxu0 0.0
  %398 = vmatpush1.msra.mxu0 0.0
  %399 = vmatprep.subr.mxu0 0.0
  %400 = vmatpush1.msra.mxu0 0.0
  %401 = vmatprep.subr.mxu0 0.0
  %402 = vmatpush1.msra.mxu0 0.0
  %403 = vmatprep.subr.mxu0 0.0
  %404 = vmatpush1.msra.mxu0 0.0
  %405 = vmatprep.subr.mxu0 0.0
  %406 = vmatpush1.msra.mxu0 0.0
  %407 = vmatprep.subr.mxu0 0.0
  %408 = vmatpush1.msra.mxu0 0.0
  %409 = vmatprep.mubr.f32.mxu0 0.0
  %410 = vmatmul.mubr.f32.gmra.mrb[0].mxu0 %v340
  %v411 = vpop.f32.mrb[0].mxu0
  %v412 = vadd.f32 0.0, %v411
  %v413 = vpop.f32.mrb[0].mxu0
  %414 = vdwg.mxu0
  %v415 = vmul.f32 %v204, %v336
  %v416 = vmul.f32 %v209, %v412
  %v417 = vsub.f32 %v415, %v416
  %v418 = vmul.f32 %v209, %v336
  %v419 = vmul.f32 %v204, %v412
  %v420 = vadd.f32 %v418, %v419
  %v421 = vmul.f32 %v218, %v336
  %v422 = vmul.f32 %v223, %v412
  %v423 = vsub.f32 %v421, %v422
  %v424 = vmul.f32 %v223, %v336
  %v425 = vmul.f32 %v218, %v412
  %v426 = vadd.f32 %v424, %v425
  %v428 = vrot.slane %v423, 2
  %v430 = vadd.f32 %v417, %v428
  %v432 = vrot.slane %v426, 2
  %v434 = vadd.f32 %v420, %v432
  %v435 = vmul.f32 %v240, %v336
  %v436 = vmul.f32 %v245, %v412
  %v437 = vsub.f32 %v435, %v436
  %v438 = vmul.f32 %v245, %v336
  %v439 = vmul.f32 %v240, %v412
  %v440 = vadd.f32 %v438, %v439
  %v442 = vrot.slane %v437, 4
  %v444 = vadd.f32 %v430, %v442
  %v446 = vrot.slane %v440, 4
  %v448 = vadd.f32 %v434, %v446
  %v449 = vmax.f32 %v444, 0.0
  %vm450 = vcmp.ge.f32.partialorder %v444, 0.0
  %v451 = vsel %vm450, %v448, 0.0
  %v452 = vld [vmem:[%s8] sm:$0x3]
  %v453 = vld [vmem:[%s9] sm:$0x3]
  %v455 = vsel %vm261, %v453, 0
  %v458 = vsel %vm265, %v451, 0
  %460 = vmatprep.subr.mxu0 0.0
  %461 = vmatpush1.msra.mxu0 %v458
  %462 = vmatprep.subr.mxu0 0.0
  %463 = vmatpush1.msra.mxu0 0.0
  %464 = vmatprep.subr.mxu0 0.0
  %465 = vmatpush1.msra.mxu0 0.0
  %466 = vmatprep.subr.mxu0 0.0
  %467 = vmatpush1.msra.mxu0 0.0
  %468 = vmatprep.subr.mxu0 0.0
  %469 = vmatpush1.msra.mxu0 0.0
  %470 = vmatprep.subr.mxu0 0.0
  %471 = vmatpush1.msra.mxu0 0.0
  %472 = vmatprep.subr.mxu0 0.0
  %473 = vmatpush1.msra.mxu0 0.0
  %474 = vmatprep.subr.mxu0 0.0
  %475 = vmatpush1.msra.mxu0 0.0
  %476 = vmatprep.subr.mxu0 0.0
  %477 = vmatpush1.msra.mxu0 0.0
  %478 = vmatprep.subr.mxu0 0.0
  %479 = vmatpush1.msra.mxu0 0.0
  %480 = vmatprep.subr.mxu0 0.0
  %481 = vmatpush1.msra.mxu0 0.0
  %482 = vmatprep.subr.mxu0 0.0
  %483 = vmatpush1.msra.mxu0 0.0
  %484 = vmatprep.subr.mxu0 0.0
  %485 = vmatpush1.msra.mxu0 0.0
  %486 = vmatprep.subr.mxu0 0.0
  %487 = vmatpush1.msra.mxu0 0.0
  %488 = vmatprep.subr.mxu0 0.0
  %489 = vmatpush1.msra.mxu0 0.0
  %490 = vmatprep.subr.mxu0 0.0
  %491 = vmatpush1.msra.mxu0 0.0
  %492 = vmatprep.subr.mxu0 0.0
  %493 = vmatpush1.msra.mxu0 0.0
  %494 = vmatprep.subr.mxu0 0.0
  %495 = vmatpush1.msra.mxu0 0.0
  %496 = vmatprep.subr.mxu0 0.0
  %497 = vmatpush1.msra.mxu0 0.0
  %498 = vmatprep.subr.mxu0 0.0
  %499 = vmatpush1.msra.mxu0 0.0
  %500 = vmatprep.subr.mxu0 0.0
  %501 = vmatpush1.msra.mxu0 0.0
  %502 = vmatprep.subr.mxu0 0.0
  %503 = vmatpush1.msra.mxu0 0.0
  %504 = vmatprep.subr.mxu0 0.0
  %505 = vmatpush1.msra.mxu0 0.0
  %506 = vmatprep.subr.mxu0 0.0
  %507 = vmatpush1.msra.mxu0 0.0
  %508 = vmatprep.subr.mxu0 0.0
  %509 = vmatpush1.msra.mxu0 0.0
  %510 = vmatprep.subr.mxu0 0.0
  %511 = vmatpush1.msra.mxu0 0.0
  %512 = vmatprep.subr.mxu0 0.0
  %513 = vmatpush1.msra.mxu0 0.0
  %514 = vmatprep.subr.mxu0 0.0
  %515 = vmatpush1.msra.mxu0 0.0
  %516 = vmatprep.subr.mxu0 0.0
  %517 = vmatpush1.msra.mxu0 0.0
  %518 = vmatprep.subr.mxu0 0.0
  %519 = vmatpush1.msra.mxu0 0.0
  %520 = vmatprep.subr.mxu0 0.0
  %521 = vmatpush1.msra.mxu0 0.0
  %522 = vmatprep.subr.mxu0 0.0
  %523 = vmatpush1.msra.mxu0 0.0
  %524 = vmatprep.mubr.f32.mxu0 0.0
  %525 = vmatmul.mubr.f32.gmra.mrb[0].mxu0 %v455
  %v526 = vpop.f32.mrb[0].mxu0
  %v527 = vadd.f32 0.0, %v526
  %v528 = vpop.f32.mrb[0].mxu0
  %529 = vdwg.mxu0
  %v531 = vsel %vm261, %v452, 0
  %v534 = vsel %vm265, %v449, 0
  %536 = vmatprep.subr.mxu0 0.0
  %537 = vmatpush1.msra.mxu0 %v534
  %538 = vmatprep.subr.mxu0 0.0
  %539 = vmatpush1.msra.mxu0 0.0
  %540 = vmatprep.subr.mxu0 0.0
  %541 = vmatpush1.msra.mxu0 0.0
  %542 = vmatprep.subr.mxu0 0.0
  %543 = vmatpush1.msra.mxu0 0.0
  %544 = vmatprep.subr.mxu0 0.0
  %545 = vmatpush1.msra.mxu0 0.0
  %546 = vmatprep.subr.mxu0 0.0
  %547 = vmatpush1.msra.mxu0 0.0
  %548 = vmatprep.subr.mxu0 0.0
  %549 = vmatpush1.msra.mxu0 0.0
  %550 = vmatprep.subr.mxu0 0.0
  %551 = vmatpush1.msra.mxu0 0.0
  %552 = vmatprep.subr.mxu0 0.0
  %553 = vmatpush1.msra.mxu0 0.0
  %554 = vmatprep.subr.mxu0 0.0
  %555 = vmatpush1.msra.mxu0 0.0
  %556 = vmatprep.subr.mxu0 0.0
  %557 = vmatpush1.msra.mxu0 0.0
  %558 = vmatprep.subr.mxu0 0.0
  %559 = vmatpush1.msra.mxu0 0.0
  %560 = vmatprep.subr.mxu0 0.0
  %561 = vmatpush1.msra.mxu0 0.0
  %562 = vmatprep.subr.mxu0 0.0
  %563 = vmatpush1.msra.mxu0 0.0
  %564 = vmatprep.subr.mxu0 0.0
  %565 = vmatpush1.msra.mxu0 0.0
  %566 = vmatprep.subr.mxu0 0.0
  %567 = vmatpush1.msra.mxu0 0.0
  %568 = vmatprep.subr.mxu0 0.0
  %569 = vmatpush1.msra.mxu0 0.0
  %570 = vmatprep.subr.mxu0 0.0
  %571 = vmatpush1.msra.mxu0 0.0
  %572 = vmatprep.subr.mxu0 0.0
  %573 = vmatpush1.msra.mxu0 0.0
  %574 = vmatprep.subr.mxu0 0.0
  %575 = vmatpush1.msra.mxu0 0.0
  %576 = vmatprep.subr.mxu0 0.0
  %577 = vmatpush1.msra.mxu0 0.0
  %578 = vmatprep.subr.mxu0 0.0
  %579 = vmatpush1.msra.mxu0 0.0
  %580 = vmatprep.subr.mxu0 0.0
  %581 = vmatpush1.msra.mxu0 0.0
  %582 = vmatprep.subr.mxu0 0.0
  %583 = vmatpush1.msra.mxu0 0.0
  %584 = vmatprep.subr.mxu0 0.0
  %585 = vmatpush1.msra.mxu0 0.0
  %586 = vmatprep.subr.mxu0 0.0
  %587 = vmatpush1.msra.mxu0 0.0
  %588 = vmatprep.subr.mxu0 0.0
  %589 = vmatpush1.msra.mxu0 0.0
  %590 = vmatprep.subr.mxu0 0.0
  %591 = vmatpush1.msra.mxu0 0.0
  %592 = vmatprep.subr.mxu0 0.0
  %593 = vmatpush1.msra.mxu0 0.0
  %594 = vmatprep.subr.mxu0 0.0
  %595 = vmatpush1.msra.mxu0 0.0
  %596 = vmatprep.subr.mxu0 0.0
  %597 = vmatpush1.msra.mxu0 0.0
  %598 = vmatprep.subr.mxu0 0.0
  %599 = vmatpush1.msra.mxu0 0.0
  %600 = vmatprep.mubr.f32.mxu0 0.0
  %601 = vmatmul.mubr.f32.gmra.mrb[0].mxu0 %v531
  %v602 = vpop.f32.mrb[0].mxu0
  %v603 = vadd.f32 %v527, %v602
  %v604 = vpop.f32.mrb[0].mxu0
  %605 = vdwg.mxu0
  %v606 = vld [vmem:[%s11] sm:$0xff]
  %v607 = vld [vmem:[%s11 + $0x8] sm:$0xff]
  %v608 = vld [vmem:[%s11 + $0x10] sm:$0xff]
  %v609 = vld [vmem:[%s11 + $0x18] sm:$0xff]
  %v610 = vld [vmem:[%s11 + $0x20] sm:$0xff]
  %v611 = vld [vmem:[%s11 + $0x28] sm:$0xff]
  %v612 = vld [vmem:[%s11 + $0x30] sm:$0xff]
  %v613 = vld [vmem:[%s11 + $0x38] sm:$0xf]
  %v614 = vld [vmem:[%s10] sm:$0x3]
  %616 = vset.pattern.permute.xlu0 0
  %617 = vperm.xlu0 %616, %v614
  %v618 = vpop.permute.xlu0 %617
  %vm620 = vcmask 490496
  %v622 = vsel %vm620, %v603, 0
  %v625 = vsel %vm51, %v613, 0
  %627 = vmatprep.subr.mxu0 0.0
  %628 = vmatpush1.msra.mxu0 %v606
  %629 = vmatprep.subr.mxu0 0.0
  %630 = vmatpush1.msra.mxu0 %v607
  %631 = vmatprep.subr.mxu0 0.0
  %632 = vmatpush1.msra.mxu0 %v608
  %633 = vmatprep.subr.mxu0 0.0
  %634 = vmatpush1.msra.mxu0 %v609
  %635 = vmatprep.subr.mxu0 0.0
  %636 = vmatpush1.msra.mxu0 %v610
  %637 = vmatprep.subr.mxu0 0.0
  %638 = vmatpush1.msra.mxu0 %v611
  %639 = vmatprep.subr.mxu0 0.0
  %640 = vmatpush1.msra.mxu0 %v612
  %641 = vmatprep.subr.mxu0 0.0
  %642 = vmatpush1.msra.mxu0 %v625
  %643 = vmatprep.subr.mxu0 0.0
  %644 = vmatpush1.msra.mxu0 0.0
  %645 = vmatprep.subr.mxu0 0.0
  %646 = vmatpush1.msra.mxu0 0.0
  %647 = vmatprep.subr.mxu0 0.0
  %648 = vmatpush1.msra.mxu0 0.0
  %649 = vmatprep.subr.mxu0 0.0
  %650 = vmatpush1.msra.mxu0 0.0
  %651 = vmatprep.subr.mxu0 0.0
  %652 = vmatpush1.msra.mxu0 0.0
  %653 = vmatprep.subr.mxu0 0.0
  %654 = vmatpush1.msra.mxu0 0.0
  %655 = vmatprep.subr.mxu0 0.0
  %656 = vmatpush1.msra.mxu0 0.0
  %657 = vmatprep.subr.mxu0 0.0
  %658 = vmatpush1.msra.mxu0 0.0
  %659 = vmatprep.subr.mxu0 0.0
  %660 = vmatpush1.msra.mxu0 0.0
  %661 = vmatprep.subr.mxu0 0.0
  %662 = vmatpush1.msra.mxu0 0.0
  %663 = vmatprep.subr.mxu0 0.0
  %664 = vmatpush1.msra.mxu0 0.0
  %665 = vmatprep.subr.mxu0 0.0
  %666 = vmatpush1.msra.mxu0 0.0
  %667 = vmatprep.subr.mxu0 0.0
  %668 = vmatpush1.msra.mxu0 0.0
  %669 = vmatprep.subr.mxu0 0.0
  %670 = vmatpush1.msra.mxu0 0.0
  %671 = vmatprep.subr.mxu0 0.0
  %672 = vmatpush1.msra.mxu0 0.0
  %673 = vmatprep.subr.mxu0 0.0
  %674 = vmatpush1.msra.mxu0 0.0
  %675 = vmatprep.subr.mxu0 0.0
  %676 = vmatpush1.msra.mxu0 0.0
  %677 = vmatprep.subr.mxu0 0.0
  %678 = vmatpush1.msra.mxu0 0.0
  %679 = vmatprep.subr.mxu0 0.0
  %680 = vmatpush1.msra.mxu0 0.0
  %681 = vmatprep.subr.mxu0 0.0
  %682 = vmatpush1.msra.mxu0 0.0
  %683 = vmatprep.subr.mxu0 0.0
  %684 = vmatpush1.msra.mxu0 0.0
  %685 = vmatprep.subr.mxu0 0.0
  %686 = vmatpush1.msra.mxu0 0.0
  %687 = vmatprep.subr.mxu0 0.0
  %688 = vmatpush1.msra.mxu0 0.0
  %689 = vmatprep.subr.mxu0 0.0
  %690 = vmatpush1.msra.mxu0 0.0
  %691 = vmatprep.mubr.f32.mxu0 0.0
  %692 = vmatmul.mubr.f32.gmra.mrb[0].mxu0 %v622
  %v693 = vpop.f32.mrb[0].mxu0
  %v694 = vadd.f32 %v618, %v693
  %v695 = vpop.f32.mrb[0].mxu0
  %696 = vdwg.mxu0
  %vm697 = vcmask 9216
  %698 = vst.msk [vmem:[%s12] sm:$0x3] %vm697, %v694
  // Predicated region
  $region50: #{_lambda_.3} parent=0 // pred_check
    _
  $region51: #{_lambda_.3} parent=0 // pred_check_branch
    %700 = sbr.rel (0) target = $region53
  $region52: #{_lambda_.3} parent=0 // pred_region
    _
  $region53: #{_lambda_.3} parent=0 // pred_fallthru
    _
  // Predicated region
  $region54: #{_lambda_.3} parent=0 // pred_check
    _
  $region55: #{_lambda_.3} parent=0 // pred_check_branch
    %702 = sbr.rel (0) target = $region57
  $region56: #{_lambda_.3} parent=0 // pred_region
    _
  $region57: #{_lambda_.3} parent=0 // pred_fallthru
    _

</llo_original>
